<compile_context>
chip_gen: v7x
topology: tpu7x:2x2x1
jax: 0.10.0
libtpu: 0.0.40
codegen_flags: <defaults>
</compile_context>

<pallas_src>
import functools

import jax
import jax.numpy as jnp
from jax.experimental import pallas as pl
from jax.experimental.pallas import tpu as pltpu  # noqa: F401  (TPU backend)

# ----------------------------------------------------------------------------
# Constants
# ----------------------------------------------------------------------------

JOINT_NUM = 21
JOINT_SHIFT_NUM = 20
C_FEAT = 64          # backbone feature channels (ConvNeXt stem width, reduced)
SIMDR_BINS = 64      # SimDR 1-D distribution length
HB_PAD = 128         # padded width of fused heat+bone 1x1-conv output (lane dense)
BONE_OFF = 64        # bone columns start at a sublane-aligned offset (post-transpose)

# ----------------------------------------------------------------------------
# Pallas kernels
# ----------------------------------------------------------------------------

def _patchify_kernel(a_ref, w_ref, b_ref, o_ref):
    """o = gelu(a @ w + b).  a:(M,K) bf16, w:(K,C) bf16, b:(1,C) f32, o:(M,C) bf16."""
    acc = jnp.dot(a_ref[...], w_ref[...], preferred_element_type=jnp.float32)
    acc = acc + b_ref[...]
    # TODO(synk): jax.nn.gelu uses the tanh approximation; PyTorch nn.GELU defaults to exact erf.
    o_ref[...] = jax.nn.gelu(acc).astype(o_ref.dtype)


def _head_kernel(feat_ref, w_hb_ref, b_hb_ref, w_xy_ref, b_xy_ref,
                 joint_ref, bone_ref, *, n, hw, k, s, bone_off):
    """Fused PoseNet head.

    feat:(N*HW,Cf) bf16 -> fused heat+bone 1x1 conv (Cf,HB_PAD) -> per-image
    transpose to channel-major -> SimDR x/y matmul (HW, 2L).  Outputs:
      joint:(N*K, 2L) f32   (cols = [x logits | y logits])
      bone :(N*S, HW) f32
    """
    feat = feat_ref[...]                                            # (N*HW, Cf)
    hb = jnp.dot(feat, w_hb_ref[...], preferred_element_type=jnp.float32)
    hb = hb + b_hb_ref[...]                                         # (N*HW, HB_PAD) f32
    w_xy = w_xy_ref[...]
    b_xy = b_xy_ref[...]

    heat_parts = []
    bone_parts = []
    for i in range(n):                                              # n tiny & static
        h_t = hb[i * hw:(i + 1) * hw, :].T                          # (HB_PAD, HW)
        heat_parts.append(h_t[:k, :])                               # (K, HW)
        bone_parts.append(h_t[bone_off:bone_off + s, :])            # (S, HW)

    heat = jnp.concatenate(heat_parts, axis=0).astype(w_xy.dtype)   # (N*K, HW) bf16
    joint_ref[...] = jnp.dot(heat, w_xy,
                             preferred_element_type=jnp.float32) + b_xy
    bone_ref[...] = jnp.concatenate(bone_parts, axis=0)


def _kl_pair_kernel(pred_ref, tgt_ref, scale_ref, o_ref, *, l_bins):
    """Fused KLDiscretLoss for both heads.

    pred/tgt: (M, 2L) rows = (n,k) with [x bins | y bins] columns.
    scale   : (M, 2) per-row weight/normalization, column = head index.
    out     : (1, 2) = per-head loss.
    """
    pred = pred_ref[...]
    tgt = tgt_ref[...]

    def kl_half(p, t):
        m = jnp.max(p, axis=-1, keepdims=True)
        lse = jnp.log(jnp.sum(jnp.exp(p - m), axis=-1, keepdims=True)) + m
        kl = t * (jnp.log(jnp.maximum(t, 1e-12)) - (p - lse))
        return jnp.mean(kl, axis=-1, keepdims=True)                 # (M, 1)

    per_row = (kl_half(pred[:, :l_bins], tgt[:, :l_bins])
               + kl_half(pred[:, l_bins:], tgt[:, l_bins:]))        # (M, 1)
    o_ref[...] = jnp.sum(per_row * scale_ref[...], axis=0, keepdims=True)


def _wmse_pair_kernel(pred_ref, tgt_ref, scale_ref, o_ref):
    """Fused BoneMapLoss for both heads.  scale already contains weight / rows."""
    d = pred_ref[...] - tgt_ref[...]
    per_row = jnp.mean(d * d, axis=-1, keepdims=True)               # (M, 1)
    o_ref[...] = jnp.sum(per_row * scale_ref[...], axis=0, keepdims=True)


# ----------------------------------------------------------------------------
# Wrappers (all heavy compute runs in the Pallas kernels above)
# ----------------------------------------------------------------------------

def backbone_forward(bp, x):
    """ConvNeXt-tiny stem (patchify 4x4 s4 conv + GELU).  x: (N,3,H,W) NCHW.

    Returns feat_flat (N*ph*pw, C_FEAT) bf16, row-major over (n, h, w).
    """
    N, Cin, Him, Wim = x.shape
    ph, pw = Him // 4, Wim // 4
    patches = (x.reshape(N, Cin, ph, 4, pw, 4)
                 .transpose(0, 2, 4, 1, 3, 5)
                 .reshape(N * ph * pw, Cin * 16)
                 .astype(jnp.bfloat16))
    return pl.pallas_call(
        _patchify_kernel,
        out_shape=jax.ShapeDtypeStruct((N * ph * pw, C_FEAT), jnp.bfloat16),
    )(patches, bp["w_patch"], bp["b_patch"])


def head_forward(hp, feat_flat, n, k, s):
    """One fused PoseNet head call.  Returns joint:(N*K,2L) f32, bone:(N*S,HW) f32."""
    hw = feat_flat.shape[0] // n
    l2 = hp["w_xy"].shape[1]
    return pl.pallas_call(
        functools.partial(_head_kernel, n=n, hw=hw, k=k, s=s, bone_off=BONE_OFF),
        out_shape=(jax.ShapeDtypeStruct((n * k, l2), jnp.float32),
                   jax.ShapeDtypeStruct((n * s, hw), jnp.float32)),
    )(feat_flat, hp["w_hb"], hp["b_hb"], hp["w_xy"], hp["b_xy"])


def fused_kl_losses(pred_s, tgt_s, w_s, pred_i, tgt_i, w_i, l_bins):
    """Both KLDiscretLoss heads in a single pallas_call.

    Semantics per head: mean over (n,k,axis) rows of w * mean_bins(KL).
    """
    ms, mi = pred_s.shape[0], pred_i.shape[0]
    pred = jnp.concatenate([pred_s, pred_i], axis=0)
    tgt = jnp.concatenate([tgt_s, tgt_i], axis=0).astype(jnp.float32)
    ws = w_s.reshape(ms, 1).astype(jnp.float32) / jnp.float32(ms * 2)
    wi = w_i.reshape(mi, 1).astype(jnp.float32) / jnp.float32(mi * 2)
    scale = jnp.concatenate([
        jnp.concatenate([ws, jnp.zeros_like(ws)], axis=1),
        jnp.concatenate([jnp.zeros_like(wi), wi], axis=1)], axis=0)   # (M, 2)
    out = pl.pallas_call(
        functools.partial(_kl_pair_kernel, l_bins=l_bins),
        out_shape=jax.ShapeDtypeStruct((1, 2), jnp.float32),
    )(pred, tgt, scale)
    return out[0, 0], out[0, 1]


def fused_bone_losses(pred_s, tgt_s, w_s, pred_i, tgt_i, w_i):
    """Both BoneMapLoss heads in a single pallas_call.

    Semantics per head: mean over (n,s) rows of w * mean_pixels((pred - tgt)^2).
    """
    ms, mi = pred_s.shape[0], pred_i.shape[0]
    pred = jnp.concatenate([pred_s, pred_i], axis=0)
    tgt = jnp.concatenate([tgt_s, tgt_i], axis=0).astype(jnp.float32)
    ws = w_s.reshape(ms, 1).astype(jnp.float32) / jnp.float32(ms)
    wi = w_i.reshape(mi, 1).astype(jnp.float32) / jnp.float32(mi)
    scale = jnp.concatenate([
        jnp.concatenate([ws, jnp.zeros_like(ws)], axis=1),
        jnp.concatenate([jnp.zeros_like(wi), wi], axis=1)], axis=0)   # (M, 2)
    out = pl.pallas_call(
        _wmse_pair_kernel,
        out_shape=jax.ShapeDtypeStruct((1, 2), jnp.float32),
    )(pred, tgt, scale)
    return out[0, 0], out[0, 1]


# ----------------------------------------------------------------------------
# Parameters
# ----------------------------------------------------------------------------

def init_head_params(key, cf, hw, k_joints, s_bones, l_bins):
    assert k_joints <= BONE_OFF and BONE_OFF + s_bones <= HB_PAD
    k1, k2, k3, k4 = jax.random.split(key, 4)
    std = 0.02
    w_heat = jax.random.normal(k1, (cf, k_joints), jnp.float32) * std
    w_bone = jax.random.normal(k2, (cf, s_bones), jnp.float32) * std
    w_hb = jnp.zeros((cf, HB_PAD), jnp.float32)
    w_hb = w_hb.at[:, :k_joints].set(w_heat)
    w_hb = w_hb.at[:, BONE_OFF:BONE_OFF + s_bones].set(w_bone)
    w_x = jax.random.normal(k3, (hw, l_bins), jnp.float32) * std
    w_y = jax.random.normal(k4, (hw, l_bins), jnp.float32) * std
    return {
        "w_hb": w_hb.astype(jnp.bfloat16),
        "b_hb": jnp.zeros((1, HB_PAD), jnp.float32),
        "w_xy": jnp.concatenate([w_x, w_y], axis=1).astype(jnp.bfloat16),
        "b_xy": jnp.zeros((1, 2 * l_bins), jnp.float32),
    }


def init_model_params(key):
    kb, ks, ki = jax.random.split(key, 3)
    hw = 8 * 8
    return {
        "backbone": {
            "w_patch": (jax.random.normal(kb, (3 * 16, C_FEAT), jnp.float32)
                        * 0.02).astype(jnp.bfloat16),
            "b_patch": jnp.zeros((1, C_FEAT), jnp.float32),
        },
        "head_single": init_head_params(ks, C_FEAT, hw, JOINT_NUM,
                                        JOINT_SHIFT_NUM, SIMDR_BINS),
        "head_inter": init_head_params(ki, C_FEAT, hw, 2 * JOINT_NUM,
                                       2 * JOINT_SHIFT_NUM, SIMDR_BINS),
    }


# ----------------------------------------------------------------------------
# Full forward (jit'ed)
# ----------------------------------------------------------------------------

@functools.partial(jax.jit, static_argnames=("mode",))
def model_forward(params, x, targets_singles, targets_inters,
                  targets_weights_singles, targets_weights_inters,
                  targets_bone_map_singles, targets_bone_map_inters,
                  targets_bone_weight_singles, targets_bone_weight_inters,
                  mode="train"):
    if mode != "train":
        # TODO(synk): 'test' branch in source references undefined joint_single_z; not implemented.
        raise ValueError("only mode='train' is supported")

    N = x.shape[0]
    L = SIMDR_BINS
    feat = backbone_forward(params["backbone"], x)                  # (N*HW, Cf)

    joint_s, bone_s = head_forward(params["head_single"], feat, N,
                                   JOINT_NUM, JOINT_SHIFT_NUM)
    joint_i, bone_i = head_forward(params["head_inter"], feat, N,
                                   2 * JOINT_NUM, 2 * JOINT_SHIFT_NUM)
    # feature_vector / soft-argmax pred_xy of the original heads are discarded
    # by the reference forward in train mode, so they are not computed here.

    tgt_s = targets_singles[:, :, :2, :].reshape(N * JOINT_NUM, 2 * L)
    tgt_i = targets_inters[:, :, :2, :].reshape(N * 2 * JOINT_NUM, 2 * L)
    kl_s, kl_i = fused_kl_losses(joint_s, tgt_s, targets_weights_singles,
                                 joint_i, tgt_i, targets_weights_inters, L)

    hw = bone_s.shape[1]
    btgt_s = targets_bone_map_singles.reshape(N * JOINT_SHIFT_NUM, hw)
    btgt_i = targets_bone_map_inters.reshape(N * 2 * JOINT_SHIFT_NUM, hw)
    mse_s, mse_i = fused_bone_losses(bone_s, btgt_s, targets_bone_weight_singles,
                                     bone_i, btgt_i, targets_bone_weight_inters)

    return {
        "simdr_single_2d": kl_s * 100.0,
        "simdr_inter_2d": kl_i * 100.0,
        "bone_map_single": mse_s,
        "bone_map_inter": mse_i,
    }


# ----------------------------------------------------------------------------
# Main
# ----------------------------------------------------------------------------

if __name__ == "__main__":
    key = jax.random.PRNGKey(0)
    kp, kx, k1, k2, k3, k4, k5, k6, k7, k8 = jax.random.split(key, 10)

    params = init_model_params(kp)

    N = 2
    H_feat, W_feat, L = 8, 8, SIMDR_BINS
    x = jax.random.normal(kx, (N, 3, 32, 32), jnp.float32)

    # SimDR targets: softmax distributions over L bins for (x, y, z) per joint.
    targets_singles = jax.nn.softmax(
        jax.random.normal(k1, (N, JOINT_NUM, 3, L), jnp.float32) * 3.0, axis=-1)
    targets_inters = jax.nn.softmax(
        jax.random.normal(k2, (N, JOINT_NUM * 2, 3, L), jnp.float32) * 3.0, axis=-1)
    targets_weights_singles = jax.random.uniform(k3, (N, JOINT_NUM), jnp.float32)
    targets_weights_inters = jax.random.uniform(k4, (N, JOINT_NUM * 2), jnp.float32)

    targets_bone_map_singles = jax.random.normal(
        k5, (N, JOINT_SHIFT_NUM, H_feat, W_feat), jnp.float32)
    targets_bone_map_inters = jax.random.normal(
        k6, (N, JOINT_SHIFT_NUM * 2, H_feat, W_feat), jnp.float32)
    targets_bone_weight_singles = jax.random.uniform(k7, (N, JOINT_SHIFT_NUM), jnp.float32)
    targets_bone_weight_inters = jax.random.uniform(k8, (N, JOINT_SHIFT_NUM * 2), jnp.float32)

    loss = model_forward(
        params, x, targets_singles, targets_inters,
        targets_weights_singles, targets_weights_inters,
        targets_bone_map_singles, targets_bone_map_inters,
        targets_bone_weight_singles, targets_bone_weight_inters,
        mode="train",
    )
    loss = jax.block_until_ready(loss)

    for k_, v_ in loss.items():
        assert jnp.isfinite(v_), f"non-finite loss {k_}"

    print("KERNEL_OK")
</pallas_src>

<mosaic_0001>
module attributes {stable_mosaic.version = 11 : i64} {
  func.func @_patchify_kernel(%arg0: memref<128x48xbf16, #tpu.memory_space<vmem>>, %arg1: memref<48x64xbf16, #tpu.memory_space<vmem>>, %arg2: memref<1x64xf32, #tpu.memory_space<vmem>>, %arg3: memref<128x64xbf16, #tpu.memory_space<vmem>>) attributes {dimension_semantics = [], scalar_prefetch = 0 : i64, scratch_operands = 0 : i64, tpu.core_type = #tpu.core_type<tc>} {
    %c0 = arith.constant 0 : index
    %c0_0 = arith.constant 0 : index
    %0 = vector.load %arg0[%c0, %c0_0] : memref<128x48xbf16, #tpu.memory_space<vmem>>, vector<128x48xbf16>
    %c0_1 = arith.constant 0 : index
    %c0_2 = arith.constant 0 : index
    %1 = vector.load %arg1[%c0_1, %c0_2] : memref<48x64xbf16, #tpu.memory_space<vmem>>, vector<48x64xbf16>
    %cst = arith.constant dense<0.000000e+00> : vector<128x64xf32>
    %2 = tpu.matmul %0, %1, %cst {dimension_numbers = #tpu.dot_dimension_numbers<[1], [0], [0], [1], [0, 0, 1, 1], [], []>} : vector<128x48xbf16>, vector<48x64xbf16>, vector<128x64xf32> -> vector<128x64xf32>
    %c0_3 = arith.constant 0 : index
    %c0_4 = arith.constant 0 : index
    %3 = vector.load %arg2[%c0_3, %c0_4] : memref<1x64xf32, #tpu.memory_space<vmem>>, vector<1x64xf32>
    %4 = vector.broadcast %3 : vector<1x64xf32> to vector<128x64xf32>
    %5 = arith.addf %2, %4 : vector<128x64xf32>
    %6 = arith.mulf %5, %5 : vector<128x64xf32>
    %7 = arith.mulf %5, %6 : vector<128x64xf32>
    %cst_5 = arith.constant 4.471500e-02 : f32
    %8 = vector.broadcast %cst_5 : f32 to vector<128x64xf32>
    %9 = arith.mulf %8, %7 : vector<128x64xf32>
    %10 = arith.addf %5, %9 : vector<128x64xf32>
    %cst_6 = arith.constant 0.797884583 : f32
    %11 = vector.broadcast %cst_6 : f32 to vector<128x64xf32>
    %12 = arith.mulf %11, %10 : vector<128x64xf32>
    %13 = math.tanh %12 : vector<128x64xf32>
    %cst_7 = arith.constant 1.000000e+00 : f32
    %14 = vector.broadcast %cst_7 : f32 to vector<128x64xf32>
    %15 = arith.addf %14, %13 : vector<128x64xf32>
    %cst_8 = arith.constant 5.000000e-01 : f32
    %16 = vector.broadcast %cst_8 : f32 to vector<128x64xf32>
    %17 = arith.mulf %16, %15 : vector<128x64xf32>
    %18 = arith.mulf %5, %17 : vector<128x64xf32>
    %19 = arith.truncf %18 : vector<128x64xf32> to vector<128x64xbf16>
    %c0_9 = arith.constant 0 : index
    %c0_10 = arith.constant 0 : index
    %20 = vector.load %arg3[%c0_9, %c0_10] : memref<128x64xbf16, #tpu.memory_space<vmem>>, vector<128x64xbf16>
    tpu.vector_store %arg3[%c0_9, %c0_10], %19 {strides = array<i32>} : memref<128x64xbf16, #tpu.memory_space<vmem>>, vector<128x64xbf16>,
    return
  }
}

module attributes {stable_mosaic.version = 11 : i64} {
  func.func @_head_kernel(%arg0: memref<128x64xbf16, #tpu.memory_space<vmem>>, %arg1: memref<64x128xbf16, #tpu.memory_space<vmem>>, %arg2: memref<1x128xf32, #tpu.memory_space<vmem>>, %arg3: memref<64x128xbf16, #tpu.memory_space<vmem>>, %arg4: memref<1x128xf32, #tpu.memory_space<vmem>>, %arg5: memref<84x128xf32, #tpu.memory_space<vmem>>, %arg6: memref<80x64xf32, #tpu.memory_space<vmem>>) attributes {dimension_semantics = [], scalar_prefetch = 0 : i64, scratch_operands = 0 : i64, tpu.core_type = #tpu.core_type<tc>} {
    %c0 = arith.constant 0 : index
    %c0_0 = arith.constant 0 : index
    %0 = vector.load %arg0[%c0, %c0_0] : memref<128x64xbf16, #tpu.memory_space<vmem>>, vector<128x64xbf16>
    %c0_1 = arith.constant 0 : index
    %c0_2 = arith.constant 0 : index
    %1 = vector.load %arg1[%c0_1, %c0_2] : memref<64x128xbf16, #tpu.memory_space<vmem>>, vector<64x128xbf16>
    %cst = arith.constant dense<0.000000e+00> : vector<128x128xf32>
    %2 = tpu.matmul %0, %1, %cst {dimension_numbers = #tpu.dot_dimension_numbers<[1], [0], [0], [1], [0, 0, 1, 1], [], []>} : vector<128x64xbf16>, vector<64x128xbf16>, vector<128x128xf32> -> vector<128x128xf32>
    %c0_3 = arith.constant 0 : index
    %c0_4 = arith.constant 0 : index
    %3 = vector.load %arg2[%c0_3, %c0_4] : memref<1x128xf32, #tpu.memory_space<vmem>>, vector<1x128xf32>
    %4 = vector.broadcast %3 : vector<1x128xf32> to vector<128x128xf32>
    %5 = arith.addf %2, %4 : vector<128x128xf32>
    %c0_5 = arith.constant 0 : index
    %c0_6 = arith.constant 0 : index
    %6 = vector.load %arg3[%c0_5, %c0_6] : memref<64x128xbf16, #tpu.memory_space<vmem>>, vector<64x128xbf16>
    %c0_7 = arith.constant 0 : index
    %c0_8 = arith.constant 0 : index
    %7 = vector.load %arg4[%c0_7, %c0_8] : memref<1x128xf32, #tpu.memory_space<vmem>>, vector<1x128xf32>
    %8 = vector.extract_strided_slice %5 {offsets = [0, 0], sizes = [64, 128], strides = [1, 1]} : vector<128x128xf32> to vector<64x128xf32>
    %9 = tpu.transpose %8, [1, 0] : vector<64x128xf32> -> vector<128x64xf32>
    %10 = vector.extract_strided_slice %9 {offsets = [0, 0], sizes = [42, 64], strides = [1, 1]} : vector<128x64xf32> to vector<42x64xf32>
    %11 = vector.extract_strided_slice %9 {offsets = [64, 0], sizes = [40, 64], strides = [1, 1]} : vector<128x64xf32> to vector<40x64xf32>
    %12 = vector.extract_strided_slice %5 {offsets = [64, 0], sizes = [64, 128], strides = [1, 1]} : vector<128x128xf32> to vector<64x128xf32>
    %13 = tpu.transpose %12, [1, 0] : vector<64x128xf32> -> vector<128x64xf32>
    %14 = vector.extract_strided_slice %13 {offsets = [0, 0], sizes = [42, 64], strides = [1, 1]} : vector<128x64xf32> to vector<42x64xf32>
    %15 = vector.extract_strided_slice %13 {offsets = [64, 0], sizes = [40, 64], strides = [1, 1]} : vector<128x64xf32> to vector<40x64xf32>
    %16 = tpu.concatenate %10, %14 in 0 : vector<42x64xf32>, vector<42x64xf32> -> vector<84x64xf32>
    %17 = arith.truncf %16 : vector<84x64xf32> to vector<84x64xbf16>
    %cst_9 = arith.constant dense<0.000000e+00> : vector<84x128xf32>
    %18 = tpu.matmul %17, %6, %cst_9 {dimension_numbers = #tpu.dot_dimension_numbers<[1], [0], [0], [1], [0, 0, 1, 1], [], []>} : vector<84x64xbf16>, vector<64x128xbf16>, vector<84x128xf32> -> vector<84x128xf32>
    %19 = vector.broadcast %7 : vector<1x128xf32> to vector<84x128xf32>
    %20 = arith.addf %18, %19 : vector<84x128xf32>
    %c0_10 = arith.constant 0 : index
    %c0_11 = arith.constant 0 : index
    %21 = vector.load %arg5[%c0_10, %c0_11] : memref<84x128xf32, #tpu.memory_space<vmem>>, vector<84x128xf32>
    tpu.vector_store %arg5[%c0_10, %c0_11], %20 {strides = array<i32>} : memref<84x128xf32, #tpu.memory_space<vmem>>, vector<84x128xf32>,
    %22 = tpu.concatenate %11, %15 in 0 : vector<40x64xf32>, vector<40x64xf32> -> vector<80x64xf32>
    %c0_12 = arith.constant 0 : index
    %c0_13 = arith.constant 0 : index
    %23 = vector.load %arg6[%c0_12, %c0_13] : memref<80x64xf32, #tpu.memory_space<vmem>>, vector<80x64xf32>
    tpu.vector_store %arg6[%c0_12, %c0_13], %22 {strides = array<i32>} : memref<80x64xf32, #tpu.memory_space<vmem>>, vector<80x64xf32>,
    return
  }
}

module attributes {stable_mosaic.version = 11 : i64} {
  func.func @_head_kernel(%arg0: memref<128x64xbf16, #tpu.memory_space<vmem>>, %arg1: memref<64x128xbf16, #tpu.memory_space<vmem>>, %arg2: memref<1x128xf32, #tpu.memory_space<vmem>>, %arg3: memref<64x128xbf16, #tpu.memory_space<vmem>>, %arg4: memref<1x128xf32, #tpu.memory_space<vmem>>, %arg5: memref<42x128xf32, #tpu.memory_space<vmem>>, %arg6: memref<40x64xf32, #tpu.memory_space<vmem>>) attributes {dimension_semantics = [], scalar_prefetch = 0 : i64, scratch_operands = 0 : i64, tpu.core_type = #tpu.core_type<tc>} {
    %c0 = arith.constant 0 : index
    %c0_0 = arith.constant 0 : index
    %0 = vector.load %arg0[%c0, %c0_0] : memref<128x64xbf16, #tpu.memory_space<vmem>>, vector<128x64xbf16>
    %c0_1 = arith.constant 0 : index
    %c0_2 = arith.constant 0 : index
    %1 = vector.load %arg1[%c0_1, %c0_2] : memref<64x128xbf16, #tpu.memory_space<vmem>>, vector<64x128xbf16>
    %cst = arith.constant dense<0.000000e+00> : vector<128x128xf32>
    %2 = tpu.matmul %0, %1, %cst {dimension_numbers = #tpu.dot_dimension_numbers<[1], [0], [0], [1], [0, 0, 1, 1], [], []>} : vector<128x64xbf16>, vector<64x128xbf16>, vector<128x128xf32> -> vector<128x128xf32>
    %c0_3 = arith.constant 0 : index
    %c0_4 = arith.constant 0 : index
    %3 = vector.load %arg2[%c0_3, %c0_4] : memref<1x128xf32, #tpu.memory_space<vmem>>, vector<1x128xf32>
    %4 = vector.broadcast %3 : vector<1x128xf32> to vector<128x128xf32>
    %5 = arith.addf %2, %4 : vector<128x128xf32>
    %c0_5 = arith.constant 0 : index
    %c0_6 = arith.constant 0 : index
    %6 = vector.load %arg3[%c0_5, %c0_6] : memref<64x128xbf16, #tpu.memory_space<vmem>>, vector<64x128xbf16>
    %c0_7 = arith.constant 0 : index
    %c0_8 = arith.constant 0 : index
    %7 = vector.load %arg4[%c0_7, %c0_8] : memref<1x128xf32, #tpu.memory_space<vmem>>, vector<1x128xf32>
    %8 = vector.extract_strided_slice %5 {offsets = [0, 0], sizes = [64, 128], strides = [1, 1]} : vector<128x128xf32> to vector<64x128xf32>
    %9 = tpu.transpose %8, [1, 0] : vector<64x128xf32> -> vector<128x64xf32>
    %10 = vector.extract_strided_slice %9 {offsets = [0, 0], sizes = [21, 64], strides = [1, 1]} : vector<128x64xf32> to vector<21x64xf32>
    %11 = vector.extract_strided_slice %9 {offsets = [64, 0], sizes = [20, 64], strides = [1, 1]} : vector<128x64xf32> to vector<20x64xf32>
    %12 = vector.extract_strided_slice %5 {offsets = [64, 0], sizes = [64, 128], strides = [1, 1]} : vector<128x128xf32> to vector<64x128xf32>
    %13 = tpu.transpose %12, [1, 0] : vector<64x128xf32> -> vector<128x64xf32>
    %14 = vector.extract_strided_slice %13 {offsets = [0, 0], sizes = [21, 64], strides = [1, 1]} : vector<128x64xf32> to vector<21x64xf32>
    %15 = vector.extract_strided_slice %13 {offsets = [64, 0], sizes = [20, 64], strides = [1, 1]} : vector<128x64xf32> to vector<20x64xf32>
    %16 = tpu.concatenate %10, %14 in 0 : vector<21x64xf32>, vector<21x64xf32> -> vector<42x64xf32>
    %17 = arith.truncf %16 : vector<42x64xf32> to vector<42x64xbf16>
    %cst_9 = arith.constant dense<0.000000e+00> : vector<42x128xf32>
    %18 = tpu.matmul %17, %6, %cst_9 {dimension_numbers = #tpu.dot_dimension_numbers<[1], [0], [0], [1], [0, 0, 1, 1], [], []>} : vector<42x64xbf16>, vector<64x128xbf16>, vector<42x128xf32> -> vector<42x128xf32>
    %19 = vector.broadcast %7 : vector<1x128xf32> to vector<42x128xf32>
    %20 = arith.addf %18, %19 : vector<42x128xf32>
    %c0_10 = arith.constant 0 : index
    %c0_11 = arith.constant 0 : index
    %21 = vector.load %arg5[%c0_10, %c0_11] : memref<42x128xf32, #tpu.memory_space<vmem>>, vector<42x128xf32>
    tpu.vector_store %arg5[%c0_10, %c0_11], %20 {strides = array<i32>} : memref<42x128xf32, #tpu.memory_space<vmem>>, vector<42x128xf32>,
    %22 = tpu.concatenate %11, %15 in 0 : vector<20x64xf32>, vector<20x64xf32> -> vector<40x64xf32>
    %c0_12 = arith.constant 0 : index
    %c0_13 = arith.constant 0 : index
    %23 = vector.load %arg6[%c0_12, %c0_13] : memref<40x64xf32, #tpu.memory_space<vmem>>, vector<40x64xf32>
    tpu.vector_store %arg6[%c0_12, %c0_13], %22 {strides = array<i32>} : memref<40x64xf32, #tpu.memory_space<vmem>>, vector<40x64xf32>,
    return
  }
}

module attributes {stable_mosaic.version = 11 : i64} {
  func.func @_kl_pair_kernel(%arg0: memref<126x128xf32, #tpu.memory_space<vmem>>, %arg1: memref<126x128xf32, #tpu.memory_space<vmem>>, %arg2: memref<126x2xf32, #tpu.memory_space<vmem>>, %arg3: memref<1x2xf32, #tpu.memory_space<vmem>>) attributes {dimension_semantics = [], scalar_prefetch = 0 : i64, scratch_operands = 0 : i64, tpu.core_type = #tpu.core_type<tc>} {
    %c0 = arith.constant 0 : index
    %c0_0 = arith.constant 0 : index
    %0 = vector.load %arg0[%c0, %c0_0] : memref<126x128xf32, #tpu.memory_space<vmem>>, vector<126x128xf32>
    %c0_1 = arith.constant 0 : index
    %c0_2 = arith.constant 0 : index
    %1 = vector.load %arg1[%c0_1, %c0_2] : memref<126x128xf32, #tpu.memory_space<vmem>>, vector<126x128xf32>
    %2 = vector.extract_strided_slice %0 {offsets = [0, 0], sizes = [126, 64], strides = [1, 1]} : vector<126x128xf32> to vector<126x64xf32>
    %3 = vector.extract_strided_slice %1 {offsets = [0, 0], sizes = [126, 64], strides = [1, 1]} : vector<126x128xf32> to vector<126x64xf32>
    %cst = arith.constant dense<0xFF800000> : vector<126xf32>
    %4 = vector.multi_reduction <maximumf>, %2, %cst [1] : vector<126x64xf32> to vector<126xf32>
    %5 = vector.shape_cast %4 : vector<126xf32> to vector<126x1xf32>
    %6 = vector.broadcast %5 : vector<126x1xf32> to vector<126x64xf32>
    %7 = arith.subf %2, %6 : vector<126x64xf32>
    %8 = math.exp %7 : vector<126x64xf32>
    %cst_3 = arith.constant dense<0.000000e+00> : vector<126xf32>
    %9 = vector.multi_reduction <add>, %8, %cst_3 [1] : vector<126x64xf32> to vector<126xf32>
    %10 = vector.shape_cast %9 : vector<126xf32> to vector<126x1xf32>
    %11 = math.log %10 : vector<126x1xf32>
    %12 = arith.addf %11, %5 : vector<126x1xf32>
    %cst_4 = arith.constant 9.99999996E-13 : f32
    %13 = vector.broadcast %cst_4 : f32 to vector<126x64xf32>
    %14 = arith.maximumf %3, %13 : vector<126x64xf32>
    %15 = math.log %14 : vector<126x64xf32>
    %16 = vector.broadcast %12 : vector<126x1xf32> to vector<126x64xf32>
    %17 = arith.subf %2, %16 : vector<126x64xf32>
    %18 = arith.subf %15, %17 : vector<126x64xf32>
    %19 = arith.mulf %3, %18 : vector<126x64xf32>
    %cst_5 = arith.constant dense<0.000000e+00> : vector<126xf32>
    %20 = vector.multi_reduction <add>, %19, %cst_5 [1] : vector<126x64xf32> to vector<126xf32>
    %21 = vector.shape_cast %20 : vector<126xf32> to vector<126x1xf32>
    %cst_6 = arith.constant 6.400000e+01 : f32
    %22 = vector.broadcast %cst_6 : f32 to vector<126x1xf32>
    %23 = arith.divf %21, %22 : vector<126x1xf32>
    %24 = vector.extract_strided_slice %0 {offsets = [0, 64], sizes = [126, 64], strides = [1, 1]} : vector<126x128xf32> to vector<126x64xf32>
    %25 = vector.extract_strided_slice %1 {offsets = [0, 64], sizes = [126, 64], strides = [1, 1]} : vector<126x128xf32> to vector<126x64xf32>
    %cst_7 = arith.constant dense<0xFF800000> : vector<126xf32>
    %26 = vector.multi_reduction <maximumf>, %24, %cst_7 [1] : vector<126x64xf32> to vector<126xf32>
    %27 = vector.shape_cast %26 : vector<126xf32> to vector<126x1xf32>
    %28 = vector.broadcast %27 : vector<126x1xf32> to vector<126x64xf32>
    %29 = arith.subf %24, %28 : vector<126x64xf32>
    %30 = math.exp %29 : vector<126x64xf32>
    %cst_8 = arith.constant dense<0.000000e+00> : vector<126xf32>
    %31 = vector.multi_reduction <add>, %30, %cst_8 [1] : vector<126x64xf32> to vector<126xf32>
    %32 = vector.shape_cast %31 : vector<126xf32> to vector<126x1xf32>
    %33 = math.log %32 : vector<126x1xf32>
    %34 = arith.addf %33, %27 : vector<126x1xf32>
    %cst_9 = arith.constant 9.99999996E-13 : f32
    %35 = vector.broadcast %cst_9 : f32 to vector<126x64xf32>
    %36 = arith.maximumf %25, %35 : vector<126x64xf32>
    %37 = math.log %36 : vector<126x64xf32>
    %38 = vector.broadcast %34 : vector<126x1xf32> to vector<126x64xf32>
    %39 = arith.subf %24, %38 : vector<126x64xf32>
    %40 = arith.subf %37, %39 : vector<126x64xf32>
    %41 = arith.mulf %25, %40 : vector<126x64xf32>
    %cst_10 = arith.constant dense<0.000000e+00> : vector<126xf32>
    %42 = vector.multi_reduction <add>, %41, %cst_10 [1] : vector<126x64xf32> to vector<126xf32>
    %43 = vector.shape_cast %42 : vector<126xf32> to vector<126x1xf32>
    %cst_11 = arith.constant 6.400000e+01 : f32
    %44 = vector.broadcast %cst_11 : f32 to vector<126x1xf32>
    %45 = arith.divf %43, %44 : vector<126x1xf32>
    %46 = arith.addf %23, %45 : vector<126x1xf32>
    %c0_12 = arith.constant 0 : index
    %c0_13 = arith.constant 0 : index
    %47 = vector.load %arg2[%c0_12, %c0_13] : memref<126x2xf32, #tpu.memory_space<vmem>>, vector<126x2xf32>
    %48 = vector.broadcast %46 : vector<126x1xf32> to vector<126x2xf32>
    %49 = arith.mulf %48, %47 : vector<126x2xf32>
    %cst_14 = arith.constant dense<0.000000e+00> : vector<2xf32>
    %50 = vector.multi_reduction <add>, %49, %cst_14 [0] : vector<126x2xf32> to vector<2xf32>
    %51 = vector.shape_cast %50 : vector<2xf32> to vector<1x2xf32>
    %c0_15 = arith.constant 0 : index
    %c0_16 = arith.constant 0 : index
    %52 = vector.load %arg3[%c0_15, %c0_16] : memref<1x2xf32, #tpu.memory_space<vmem>>, vector<1x2xf32>
    tpu.vector_store %arg3[%c0_15, %c0_16], %51 {strides = array<i32>} : memref<1x2xf32, #tpu.memory_space<vmem>>, vector<1x2xf32>,
    return
  }
}

module attributes {stable_mosaic.version = 11 : i64} {
  func.func @_wmse_pair_kernel(%arg0: memref<120x64xf32, #tpu.memory_space<vmem>>, %arg1: memref<120x64xf32, #tpu.memory_space<vmem>>, %arg2: memref<120x2xf32, #tpu.memory_space<vmem>>, %arg3: memref<1x2xf32, #tpu.memory_space<vmem>>) attributes {dimension_semantics = [], scalar_prefetch = 0 : i64, scratch_operands = 0 : i64, tpu.core_type = #tpu.core_type<tc>} {
    %c0 = arith.constant 0 : index
    %c0_0 = arith.constant 0 : index
    %0 = vector.load %arg0[%c0, %c0_0] : memref<120x64xf32, #tpu.memory_space<vmem>>, vector<120x64xf32>
    %c0_1 = arith.constant 0 : index
    %c0_2 = arith.constant 0 : index
    %1 = vector.load %arg1[%c0_1, %c0_2] : memref<120x64xf32, #tpu.memory_space<vmem>>, vector<120x64xf32>
    %2 = arith.subf %0, %1 : vector<120x64xf32>
    %3 = arith.mulf %2, %2 : vector<120x64xf32>
    %cst = arith.constant dense<0.000000e+00> : vector<120xf32>
    %4 = vector.multi_reduction <add>, %3, %cst [1] : vector<120x64xf32> to vector<120xf32>
    %5 = vector.shape_cast %4 : vector<120xf32> to vector<120x1xf32>
    %cst_3 = arith.constant 6.400000e+01 : f32
    %6 = vector.broadcast %cst_3 : f32 to vector<120x1xf32>
    %7 = arith.divf %5, %6 : vector<120x1xf32>
    %c0_4 = arith.constant 0 : index
    %c0_5 = arith.constant 0 : index
    %8 = vector.load %arg2[%c0_4, %c0_5] : memref<120x2xf32, #tpu.memory_space<vmem>>, vector<120x2xf32>
    %9 = vector.broadcast %7 : vector<120x1xf32> to vector<120x2xf32>
    %10 = arith.mulf %9, %8 : vector<120x2xf32>
    %cst_6 = arith.constant dense<0.000000e+00> : vector<2xf32>
    %11 = vector.multi_reduction <add>, %10, %cst_6 [0] : vector<120x2xf32> to vector<2xf32>
    %12 = vector.shape_cast %11 : vector<2xf32> to vector<1x2xf32>
    %c0_7 = arith.constant 0 : index
    %c0_8 = arith.constant 0 : index
    %13 = vector.load %arg3[%c0_7, %c0_8] : memref<1x2xf32, #tpu.memory_space<vmem>>, vector<1x2xf32>
    tpu.vector_store %arg3[%c0_7, %c0_8], %12 {strides = array<i32>} : memref<1x2xf32, #tpu.memory_space<vmem>>, vector<1x2xf32>,
    return
  }
}

</mosaic_0001>

<llo_original>
// kernel: model_forward.5
$region0: #{model_forward.5}
  #allocation0 [shape = 'u32[]', space=smem, size = 0x4, offset = 0x4, fixed_abs, tag = 'smem constant byte address 0x4 - core index']
  #allocation1 [shape = 'u32[144,128]{1,0:T(1,128)}', space=vmem, size = 0x12000, scoped, tag = 'internal scratch']
  %s0 = inlined_call_operand.vmem [shape: bf16[128,48], index: 0, kind: input, shape index: {}]
  %s1 = inlined_call_operand.vmem [shape: bf16[48,64], index: 1, kind: input, shape index: {}]
  %s2 = inlined_call_operand.vmem [shape: f32[1,64], index: 2, kind: input, shape index: {}]
  %s3 = inlined_call_operand.vmem [shape: bf16[128,64], index: 3, kind: output, shape index: {}]
  %s4 = sld [smem:[#allocation0]]
  $region22: #{model_forward.5} parent=0
    _
  %s6 = ssub.s32 1, %s4
  %s7 = scalar_select 0, %s6, %s4
  // Predicated region
  $region2: #{model_forward.5} parent=0 // pred_check
    _
  $region3: #{model_forward.5} parent=0 // pred_check_branch
    %9 = sbr.rel (0) target = $region5
  $region4: #{model_forward.5} parent=0 // pred_region
    _
  $region5: #{model_forward.5} parent=0 // pred_fallthru
    _
  // Predicated region
  $region6: #{model_forward.5} parent=0 // pred_check
    _
  $region7: #{model_forward.5} parent=0 // pred_check_branch
    %11 = sbr.rel (0) target = $region9
  $region8: #{model_forward.5} parent=0 // pred_region
    _
  $region9: #{model_forward.5} parent=0 // pred_fallthru
    _
  // Predicated region
  $region10: #{model_forward.5} parent=0 // pred_check
    _
  $region11: #{model_forward.5} parent=0 // pred_check_branch
    %13 = sbr.rel (0) target = $region13
  $region12: #{model_forward.5} parent=0 // pred_region
    _
  $region13: #{model_forward.5} parent=0 // pred_fallthru
    _
  %v15 = vld [vmem:[%s0] sm:$0xf]
  %v16 = vld [vmem:[%s0 + $0x4] sm:$0xf]
  %v17 = vld [vmem:[%s0 + $0x8] sm:$0xf]
  %v18 = vld [vmem:[%s0 + $0xc] sm:$0xf]
  %v19 = vld [vmem:[%s0 + $0x10] sm:$0xf]
  %v20 = vld [vmem:[%s0 + $0x14] sm:$0xf]
  %v21 = vld [vmem:[%s0 + $0x18] sm:$0xf]
  %v22 = vld [vmem:[%s0 + $0x1c] sm:$0xf]
  %v23 = vld [vmem:[%s0 + $0x20] sm:$0xf]
  %v24 = vld [vmem:[%s0 + $0x24] sm:$0xf]
  %v25 = vld [vmem:[%s0 + $0x28] sm:$0xf]
  %v26 = vld [vmem:[%s0 + $0x2c] sm:$0xf]
  %v27 = vld [vmem:[%s0 + $0x30] sm:$0xf]
  %v28 = vld [vmem:[%s0 + $0x34] sm:$0xf]
  %v29 = vld [vmem:[%s0 + $0x38] sm:$0xf]
  %v30 = vld [vmem:[%s0 + $0x3c] sm:$0xf]
  %v31 = vld [vmem:[%s1] sm:$0xf]
  %v32 = vld [vmem:[%s1 + $0x4] sm:$0xf]
  %v33 = vld [vmem:[%s1 + $0x8] sm:$0xf]
  %v34 = vld [vmem:[%s1 + $0xc] sm:$0xf]
  %v35 = vld [vmem:[%s1 + $0x10] sm:$0xf]
  %v36 = vld [vmem:[%s1 + $0x14] sm:$0xf]
  %v37 = vld [vmem:[%s2] sm:$0x1]
  %v39 = vlaneseq
  %v40 = vshrl.u32 %v39, 7
  %v41 = vsub.s32 0, %v40
  %v42 = vrot.slane %v37, %v41
  %v60 = vunpack.c.l.b16 %v15
  %v61 = vunpack.c.l.b16 %v16
  %v62 = vunpack.c.l.b16 %v17
  %v63 = vunpack.c.l.b16 %v18
  %v64 = vunpack.c.l.b16 %v19
  %v65 = vunpack.c.l.b16 %v20
  %v66 = vunpack.c.l.b16 %v21
  %v67 = vunpack.c.l.b16 %v22
  %v68 = vunpack.c.l.b16 %v23
  %v69 = vunpack.c.l.b16 %v24
  %v70 = vunpack.c.l.b16 %v25
  %v71 = vunpack.c.l.b16 %v26
  %v72 = vunpack.c.l.b16 %v27
  %v73 = vunpack.c.l.b16 %v28
  %v74 = vunpack.c.l.b16 %v29
  %v75 = vunpack.c.l.b16 %v30
  %v76 = vpack.c.b16 %v61, %v60
  %v77 = vpack.c.b16 %v63, %v62
  %v78 = vpack.c.b16 %v65, %v64
  %v79 = vpack.c.b16 %v67, %v66
  %v80 = vpack.c.b16 %v69, %v68
  %v81 = vpack.c.b16 %v71, %v70
  %v82 = vpack.c.b16 %v73, %v72
  %v83 = vpack.c.b16 %v75, %v74
  %v90 = vunpack.c.l.b16 %v31
  %v91 = vunpack.c.l.b16 %v32
  %v92 = vunpack.c.l.b16 %v33
  %v93 = vunpack.c.l.b16 %v34
  %v94 = vunpack.c.l.b16 %v35
  %v95 = vunpack.c.l.b16 %v36
  %v96 = vpack.c.b16 %v91, %v90
  %v97 = vpack.c.b16 %v93, %v92
  %v98 = vpack.c.b16 %v95, %v94
  %vm102 = vcmask 392192
  %v104 = vsel %vm102, %v76, 0
  %v107 = vsel %vm102, %v77, 0
  %v110 = vsel %vm102, %v78, 0
  %v113 = vsel %vm102, %v79, 0
  %v116 = vsel %vm102, %v80, 0
  %v119 = vsel %vm102, %v81, 0
  %v122 = vsel %vm102, %v82, 0
  %v125 = vsel %vm102, %v83, 0
  %127 = vmatprep.subr.bf16.mxu0 0
  %128 = vmatpush1.bf16.msra.mxu0 %v96
  %129 = vmatprep.subr.bf16.mxu0 0
  %130 = vmatpush1.bf16.msra.mxu0 %v97
  %131 = vmatprep.subr.bf16.mxu0 0
  %132 = vmatpush1.bf16.msra.mxu0 %v98
  %133 = vmatprep.subr.bf16.mxu0 0
  %134 = vmatpush1.bf16.msra.mxu0 0
  %135 = vmatprep.subr.bf16.mxu0 0
  %136 = vmatpush1.bf16.msra.mxu0 0
  %137 = vmatprep.subr.bf16.mxu0 0
  %138 = vmatpush1.bf16.msra.mxu0 0
  %139 = vmatprep.subr.bf16.mxu0 0
  %140 = vmatpush1.bf16.msra.mxu0 0
  %141 = vmatprep.subr.bf16.mxu0 0
  %142 = vmatpush1.bf16.msra.mxu0 0
  %143 = vmatprep.subr.bf16.mxu0 0
  %144 = vmatpush1.bf16.msra.mxu0 0
  %145 = vmatprep.subr.bf16.mxu0 0
  %146 = vmatpush1.bf16.msra.mxu0 0
  %147 = vmatprep.subr.bf16.mxu0 0
  %148 = vmatpush1.bf16.msra.mxu0 0
  %149 = vmatprep.subr.bf16.mxu0 0
  %150 = vmatpush1.bf16.msra.mxu0 0
  %151 = vmatprep.subr.bf16.mxu0 0
  %152 = vmatpush1.bf16.msra.mxu0 0
  %153 = vmatprep.subr.bf16.mxu0 0
  %154 = vmatpush1.bf16.msra.mxu0 0
  %155 = vmatprep.subr.bf16.mxu0 0
  %156 = vmatpush1.bf16.msra.mxu0 0
  %157 = vmatprep.subr.bf16.mxu0 0
  %158 = vmatpush1.bf16.msra.mxu0 0
  %159 = vmatprep.mubr.bf16.mxu0 0
  %160 = vmatmul.mubr.bf16.gmra.mrb[0].mxu0 %v104
  %v161 = vpop.f32.mrb[0].mxu0
  %v162 = vadd.f32 %v42, %v161
  %v163 = vpop.f32.mrb[0].mxu0
  %v164 = vpop.f32.mrb[0].mxu0
  %v165 = vadd.f32 %v42, %v164
  %v166 = vpop.f32.mrb[0].mxu0
  %167 = vmatprep.mubr.bf16.mxu0 0
  %168 = vmatmul.mubr.bf16.gmra.mrb[0].mxu0 %v107
  %v169 = vpop.f32.mrb[0].mxu0
  %v170 = vadd.f32 %v42, %v169
  %v171 = vpop.f32.mrb[0].mxu0
  %v172 = vpop.f32.mrb[0].mxu0
  %v173 = vadd.f32 %v42, %v172
  %v174 = vpop.f32.mrb[0].mxu0
  %175 = vmatprep.mubr.bf16.mxu0 0
  %176 = vmatmul.mubr.bf16.gmra.mrb[0].mxu0 %v110
  %v177 = vpop.f32.mrb[0].mxu0
  %v178 = vadd.f32 %v42, %v177
  %v179 = vpop.f32.mrb[0].mxu0
  %v180 = vpop.f32.mrb[0].mxu0
  %v181 = vadd.f32 %v42, %v180
  %v182 = vpop.f32.mrb[0].mxu0
  %183 = vmatprep.mubr.bf16.mxu0 0
  %184 = vmatmul.mubr.bf16.gmra.mrb[0].mxu0 %v113
  %v185 = vpop.f32.mrb[0].mxu0
  %v186 = vadd.f32 %v42, %v185
  %v187 = vpop.f32.mrb[0].mxu0
  %v188 = vpop.f32.mrb[0].mxu0
  %v189 = vadd.f32 %v42, %v188
  %v190 = vpop.f32.mrb[0].mxu0
  %191 = vmatprep.mubr.bf16.mxu0 0
  %192 = vmatmul.mubr.bf16.gmra.mrb[0].mxu0 %v116
  %v193 = vpop.f32.mrb[0].mxu0
  %v194 = vadd.f32 %v42, %v193
  %v195 = vpop.f32.mrb[0].mxu0
  %v196 = vpop.f32.mrb[0].mxu0
  %v197 = vadd.f32 %v42, %v196
  %v198 = vpop.f32.mrb[0].mxu0
  %199 = vmatprep.mubr.bf16.mxu0 0
  %200 = vmatmul.mubr.bf16.gmra.mrb[0].mxu0 %v119
  %v201 = vpop.f32.mrb[0].mxu0
  %v202 = vadd.f32 %v42, %v201
  %v203 = vpop.f32.mrb[0].mxu0
  %v204 = vpop.f32.mrb[0].mxu0
  %v205 = vadd.f32 %v42, %v204
  %v206 = vpop.f32.mrb[0].mxu0
  %207 = vmatprep.mubr.bf16.mxu0 0
  %208 = vmatmul.mubr.bf16.gmra.mrb[0].mxu0 %v122
  %v209 = vpop.f32.mrb[0].mxu0
  %v210 = vadd.f32 %v42, %v209
  %v211 = vpop.f32.mrb[0].mxu0
  %v212 = vpop.f32.mrb[0].mxu0
  %v213 = vadd.f32 %v42, %v212
  %v214 = vpop.f32.mrb[0].mxu0
  %215 = vmatprep.mubr.bf16.mxu0 0
  %216 = vmatmul.mubr.bf16.gmra.mrb[0].mxu0 %v125
  %v217 = vpop.f32.mrb[0].mxu0
  %v218 = vadd.f32 %v42, %v217
  %v219 = vpop.f32.mrb[0].mxu0
  %v220 = vpop.f32.mrb[0].mxu0
  %v221 = vadd.f32 %v42, %v220
  %v222 = vpop.f32.mrb[0].mxu0
  %223 = vdwg.mxu0
  %v224 = vmul.f32 %v162, %v162
  %v225 = vmul.f32 %v165, %v165
  %v226 = vmul.f32 %v170, %v170
  %v227 = vmul.f32 %v173, %v173
  %v228 = vmul.f32 %v178, %v178
  %v229 = vmul.f32 %v181, %v181
  %v230 = vmul.f32 %v186, %v186
  %v231 = vmul.f32 %v189, %v189
  %v232 = vmul.f32 %v194, %v194
  %v233 = vmul.f32 %v197, %v197
  %v234 = vmul.f32 %v202, %v202
  %v235 = vmul.f32 %v205, %v205
  %v236 = vmul.f32 %v210, %v210
  %v237 = vmul.f32 %v213, %v213
  %v238 = vmul.f32 %v218, %v218
  %v239 = vmul.f32 %v221, %v221
  %v240 = vmul.f32 %v162, %v224
  %v241 = vmul.f32 %v165, %v225
  %v242 = vmul.f32 %v170, %v226
  %v243 = vmul.f32 %v173, %v227
  %v244 = vmul.f32 %v178, %v228
  %v245 = vmul.f32 %v181, %v229
  %v246 = vmul.f32 %v186, %v230
  %v247 = vmul.f32 %v189, %v231
  %v248 = vmul.f32 %v194, %v232
  %v249 = vmul.f32 %v197, %v233
  %v250 = vmul.f32 %v202, %v234
  %v251 = vmul.f32 %v205, %v235
  %v252 = vmul.f32 %v210, %v236
  %v253 = vmul.f32 %v213, %v237
  %v254 = vmul.f32 %v218, %v238
  %v255 = vmul.f32 %v221, %v239
  %v256 = vmul.f32 %v240, 0.044715
  %v257 = vmul.f32 %v241, 0.044715
  %v258 = vmul.f32 %v242, 0.044715
  %v259 = vmul.f32 %v243, 0.044715
  %v260 = vmul.f32 %v244, 0.044715
  %v261 = vmul.f32 %v245, 0.044715
  %v262 = vmul.f32 %v246, 0.044715
  %v263 = vmul.f32 %v247, 0.044715
  %v264 = vmul.f32 %v248, 0.044715
  %v265 = vmul.f32 %v249, 0.044715
  %v266 = vmul.f32 %v250, 0.044715
  %v267 = vmul.f32 %v251, 0.044715
  %v268 = vmul.f32 %v252, 0.044715
  %v269 = vmul.f32 %v253, 0.044715
  %v270 = vmul.f32 %v254, 0.044715
  %v271 = vmul.f32 %v255, 0.044715
  %v272 = vadd.f32 %v162, %v256
  %v273 = vadd.f32 %v165, %v257
  %v274 = vadd.f32 %v170, %v258
  %v275 = vadd.f32 %v173, %v259
  %v276 = vadd.f32 %v178, %v260
  %v277 = vadd.f32 %v181, %v261
  %v278 = vadd.f32 %v186, %v262
  %v279 = vadd.f32 %v189, %v263
  %v280 = vadd.f32 %v194, %v264
  %v281 = vadd.f32 %v197, %v265
  %v282 = vadd.f32 %v202, %v266
  %v283 = vadd.f32 %v205, %v267
  %v284 = vadd.f32 %v210, %v268
  %v285 = vadd.f32 %v213, %v269
  %v286 = vadd.f32 %v218, %v270
  %v287 = vadd.f32 %v221, %v271
  %v288 = vmul.f32 %v272, 0.7978846
  %v289 = vmul.f32 %v273, 0.7978846
  %v290 = vmul.f32 %v274, 0.7978846
  %v291 = vmul.f32 %v275, 0.7978846
  %v292 = vmul.f32 %v276, 0.7978846
  %v293 = vmul.f32 %v277, 0.7978846
  %v294 = vmul.f32 %v278, 0.7978846
  %v295 = vmul.f32 %v279, 0.7978846
  %v296 = vmul.f32 %v280, 0.7978846
  %v297 = vmul.f32 %v281, 0.7978846
  %v298 = vmul.f32 %v282, 0.7978846
  %v299 = vmul.f32 %v283, 0.7978846
  %v300 = vmul.f32 %v284, 0.7978846
  %v301 = vmul.f32 %v285, 0.7978846
  %v302 = vmul.f32 %v286, 0.7978846
  %v303 = vmul.f32 %v287, 0.7978846
  %v304 = vtanh.pop %v288
  %v305 = vtanh.pop %v289
  %v306 = vtanh.pop %v290
  %v307 = vtanh.pop %v291
  %v308 = vtanh.pop %v292
  %v309 = vtanh.pop %v293
  %v310 = vtanh.pop %v294
  %v311 = vtanh.pop %v295
  %v312 = vtanh.pop %v296
  %v313 = vtanh.pop %v297
  %v314 = vtanh.pop %v298
  %v315 = vtanh.pop %v299
  %v316 = vtanh.pop %v300
  %v317 = vtanh.pop %v301
  %v318 = vtanh.pop %v302
  %v319 = vtanh.pop %v303
  %v320 = vadd.f32 %v304, 1.0
  %v321 = vadd.f32 %v305, 1.0
  %v322 = vadd.f32 %v306, 1.0
  %v323 = vadd.f32 %v307, 1.0
  %v324 = vadd.f32 %v308, 1.0
  %v325 = vadd.f32 %v309, 1.0
  %v326 = vadd.f32 %v310, 1.0
  %v327 = vadd.f32 %v311, 1.0
  %v328 = vadd.f32 %v312, 1.0
  %v329 = vadd.f32 %v313, 1.0
  %v330 = vadd.f32 %v314, 1.0
  %v331 = vadd.f32 %v315, 1.0
  %v332 = vadd.f32 %v316, 1.0
  %v333 = vadd.f32 %v317, 1.0
  %v334 = vadd.f32 %v318, 1.0
  %v335 = vadd.f32 %v319, 1.0
  %v336 = vmul.f32 %v320, 0.5
  %v337 = vmul.f32 %v321, 0.5
  %v338 = vmul.f32 %v322, 0.5
  %v339 = vmul.f32 %v323, 0.5
  %v340 = vmul.f32 %v324, 0.5
  %v341 = vmul.f32 %v325, 0.5
  %v342 = vmul.f32 %v326, 0.5
  %v343 = vmul.f32 %v327, 0.5
  %v344 = vmul.f32 %v328, 0.5
  %v345 = vmul.f32 %v329, 0.5
  %v346 = vmul.f32 %v330, 0.5
  %v347 = vmul.f32 %v331, 0.5
  %v348 = vmul.f32 %v332, 0.5
  %v349 = vmul.f32 %v333, 0.5
  %v350 = vmul.f32 %v334, 0.5
  %v351 = vmul.f32 %v335, 0.5
  %v352 = vmul.f32 %v162, %v336
  %v353 = vmul.f32 %v165, %v337
  %v354 = vmul.f32 %v170, %v338
  %v355 = vmul.f32 %v173, %v339
  %v356 = vmul.f32 %v178, %v340
  %v357 = vmul.f32 %v181, %v341
  %v358 = vmul.f32 %v186, %v342
  %v359 = vmul.f32 %v189, %v343
  %v360 = vmul.f32 %v194, %v344
  %v361 = vmul.f32 %v197, %v345
  %v362 = vmul.f32 %v202, %v346
  %v363 = vmul.f32 %v205, %v347
  %v364 = vmul.f32 %v210, %v348
  %v365 = vmul.f32 %v213, %v349
  %v366 = vmul.f32 %v218, %v350
  %v367 = vmul.f32 %v221, %v351
  %v368 = vpack.c.bf16 %v353, %v352
  %v369 = vpack.c.bf16 %v355, %v354
  %v370 = vpack.c.bf16 %v357, %v356
  %v371 = vpack.c.bf16 %v359, %v358
  %v372 = vpack.c.bf16 %v361, %v360
  %v373 = vpack.c.bf16 %v363, %v362
  %v374 = vpack.c.bf16 %v365, %v364
  %v375 = vpack.c.bf16 %v367, %v366
  %v384 = vunpack.c.l.b16 %v368
  %v385 = vunpack.c.h.b16 %v368
  %v386 = vunpack.c.l.b16 %v369
  %v387 = vunpack.c.h.b16 %v369
  %v388 = vunpack.c.l.b16 %v370
  %v389 = vunpack.c.h.b16 %v370
  %v390 = vunpack.c.l.b16 %v371
  %v391 = vunpack.c.h.b16 %v371
  %v392 = vunpack.c.l.b16 %v372
  %v393 = vunpack.c.h.b16 %v372
  %v394 = vunpack.c.l.b16 %v373
  %v395 = vunpack.c.h.b16 %v373
  %v396 = vunpack.c.l.b16 %v374
  %v397 = vunpack.c.h.b16 %v374
  %v398 = vunpack.c.l.b16 %v375
  %v399 = vunpack.c.h.b16 %v375
  %v400 = vpack.c.b16 %v384, %v384
  %v401 = vpack.c.b16 %v385, %v385
  %v402 = vpack.c.b16 %v386, %v386
  %v403 = vpack.c.b16 %v387, %v387
  %v404 = vpack.c.b16 %v388, %v388
  %v405 = vpack.c.b16 %v389, %v389
  %v406 = vpack.c.b16 %v390, %v390
  %v407 = vpack.c.b16 %v391, %v391
  %v408 = vpack.c.b16 %v392, %v392
  %v409 = vpack.c.b16 %v393, %v393
  %v410 = vpack.c.b16 %v394, %v394
  %v411 = vpack.c.b16 %v395, %v395
  %v412 = vpack.c.b16 %v396, %v396
  %v413 = vpack.c.b16 %v397, %v397
  %v414 = vpack.c.b16 %v398, %v398
  %v415 = vpack.c.b16 %v399, %v399
  %vm432 = vcmask 519168
  %433 = vst.msk [vmem:[%s3] sm:$0xf] %vm432, %v400
  %434 = vst.msk [vmem:[%s3 + $0x4] sm:$0xf] %vm432, %v401
  %435 = vst.msk [vmem:[%s3 + $0x8] sm:$0xf] %vm432, %v402
  %436 = vst.msk [vmem:[%s3 + $0xc] sm:$0xf] %vm432, %v403
  %437 = vst.msk [vmem:[%s3 + $0x10] sm:$0xf] %vm432, %v404
  %438 = vst.msk [vmem:[%s3 + $0x14] sm:$0xf] %vm432, %v405
  %439 = vst.msk [vmem:[%s3 + $0x18] sm:$0xf] %vm432, %v406
  %440 = vst.msk [vmem:[%s3 + $0x1c] sm:$0xf] %vm432, %v407
  %441 = vst.msk [vmem:[%s3 + $0x20] sm:$0xf] %vm432, %v408
  %442 = vst.msk [vmem:[%s3 + $0x24] sm:$0xf] %vm432, %v409
  %443 = vst.msk [vmem:[%s3 + $0x28] sm:$0xf] %vm432, %v410
  %444 = vst.msk [vmem:[%s3 + $0x2c] sm:$0xf] %vm432, %v411
  %445 = vst.msk [vmem:[%s3 + $0x30] sm:$0xf] %vm432, %v412
  %446 = vst.msk [vmem:[%s3 + $0x34] sm:$0xf] %vm432, %v413
  %447 = vst.msk [vmem:[%s3 + $0x38] sm:$0xf] %vm432, %v414
  %448 = vst.msk [vmem:[%s3 + $0x3c] sm:$0xf] %vm432, %v415
  // Predicated region
  $region14: #{model_forward.5} parent=0 // pred_check
    _
  $region15: #{model_forward.5} parent=0 // pred_check_branch
    %450 = sbr.rel (0) target = $region17
  $region16: #{model_forward.5} parent=0 // pred_region
    _
  $region17: #{model_forward.5} parent=0 // pred_fallthru
    _
  // Predicated region
  $region18: #{model_forward.5} parent=0 // pred_check
    _
  $region19: #{model_forward.5} parent=0 // pred_check_branch
    %452 = sbr.rel (0) target = $region21
  $region20: #{model_forward.5} parent=0 // pred_region
    _
  $region21: #{model_forward.5} parent=0 // pred_fallthru
    _

// kernel: model_forward.7
$region0: #{model_forward.7}
  #allocation0 [shape = 'u32[]', space=smem, size = 0x4, offset = 0x4, fixed_abs, tag = 'smem constant byte address 0x4 - core index']
  #allocation1 [shape = 'u32[144,128]{1,0:T(1,128)}', space=vmem, size = 0x12000, scoped, tag = 'internal scratch']
  %s0 = inlined_call_operand.vmem [shape: bf16[128,64], index: 0, kind: input, shape index: {}]
  %s1 = inlined_call_operand.vmem [shape: bf16[64,128], index: 1, kind: input, shape index: {}]
  %s2 = inlined_call_operand.vmem [shape: f32[1,128], index: 2, kind: input, shape index: {}]
  %s3 = inlined_call_operand.vmem [shape: bf16[64,128], index: 3, kind: input, shape index: {}]
  %s4 = inlined_call_operand.vmem [shape: f32[1,128], index: 4, kind: input, shape index: {}]
  %s5 = inlined_call_operand.vmem [shape: f32[84,128], index: 5, kind: output, shape index: {0}]
  %s6 = inlined_call_operand.vmem [shape: f32[80,64], index: 6, kind: output, shape index: {1}]
  %7 = xla_tuple %s5, %s6
  %s8 = sld [smem:[#allocation0]]
  $region38: #{model_forward.7} parent=0
    _
  %s10 = ssub.s32 1, %s8
  %s11 = scalar_select 0, %s10, %s8
  // Predicated region
  $region2: #{model_forward.7} parent=0 // pred_check
    _
  $region3: #{model_forward.7} parent=0 // pred_check_branch
    %13 = sbr.rel (0) target = $region5
  $region4: #{model_forward.7} parent=0 // pred_region
    _
  $region5: #{model_forward.7} parent=0 // pred_fallthru
    _
  // Predicated region
  $region6: #{model_forward.7} parent=0 // pred_check
    _
  $region7: #{model_forward.7} parent=0 // pred_check_branch
    %15 = sbr.rel (0) target = $region9
  $region8: #{model_forward.7} parent=0 // pred_region
    _
  $region9: #{model_forward.7} parent=0 // pred_fallthru
    _
  // Predicated region
  $region10: #{model_forward.7} parent=0 // pred_check
    _
  $region11: #{model_forward.7} parent=0 // pred_check_branch
    %17 = sbr.rel (0) target = $region13
  $region12: #{model_forward.7} parent=0 // pred_region
    _
  $region13: #{model_forward.7} parent=0 // pred_fallthru
    _
  // Predicated region
  $region14: #{model_forward.7} parent=0 // pred_check
    _
  $region15: #{model_forward.7} parent=0 // pred_check_branch
    %19 = sbr.rel (0) target = $region17
  $region16: #{model_forward.7} parent=0 // pred_region
    _
  $region17: #{model_forward.7} parent=0 // pred_fallthru
    _
  // Predicated region
  $region18: #{model_forward.7} parent=0 // pred_check
    _
  $region19: #{model_forward.7} parent=0 // pred_check_branch
    %21 = sbr.rel (0) target = $region21
  $region20: #{model_forward.7} parent=0 // pred_region
    _
  $region21: #{model_forward.7} parent=0 // pred_fallthru
    _
  %v23 = vld [vmem:[%s0] sm:$0xf]
  %v24 = vld [vmem:[%s0 + $0x4] sm:$0xf]
  %v25 = vld [vmem:[%s0 + $0x8] sm:$0xf]
  %v26 = vld [vmem:[%s0 + $0xc] sm:$0xf]
  %v27 = vld [vmem:[%s0 + $0x10] sm:$0xf]
  %v28 = vld [vmem:[%s0 + $0x14] sm:$0xf]
  %v29 = vld [vmem:[%s0 + $0x18] sm:$0xf]
  %v30 = vld [vmem:[%s0 + $0x1c] sm:$0xf]
  %v31 = vld [vmem:[%s0 + $0x20] sm:$0xf]
  %v32 = vld [vmem:[%s0 + $0x24] sm:$0xf]
  %v33 = vld [vmem:[%s0 + $0x28] sm:$0xf]
  %v34 = vld [vmem:[%s0 + $0x2c] sm:$0xf]
  %v35 = vld [vmem:[%s0 + $0x30] sm:$0xf]
  %v36 = vld [vmem:[%s0 + $0x34] sm:$0xf]
  %v37 = vld [vmem:[%s0 + $0x38] sm:$0xf]
  %v38 = vld [vmem:[%s0 + $0x3c] sm:$0xf]
  %v39 = vld [vmem:[%s1] sm:$0xf]
  %v40 = vld [vmem:[%s1 + $0x4] sm:$0xf]
  %v41 = vld [vmem:[%s1 + $0x8] sm:$0xf]
  %v42 = vld [vmem:[%s1 + $0xc] sm:$0xf]
  %v43 = vld [vmem:[%s1 + $0x10] sm:$0xf]
  %v44 = vld [vmem:[%s1 + $0x14] sm:$0xf]
  %v45 = vld [vmem:[%s1 + $0x18] sm:$0xf]
  %v46 = vld [vmem:[%s1 + $0x1c] sm:$0xf]
  %v47 = vld [vmem:[%s2] sm:$0x1]
  %v49 = vlaneseq
  %v50 = vshrl.u32 %v49, 7
  %v51 = vsub.s32 0, %v50
  %v52 = vrot.slane %v47, %v51
  %v70 = vunpack.c.l.b16 %v23
  %v71 = vunpack.c.l.b16 %v24
  %v72 = vunpack.c.l.b16 %v25
  %v73 = vunpack.c.l.b16 %v26
  %v74 = vunpack.c.l.b16 %v27
  %v75 = vunpack.c.l.b16 %v28
  %v76 = vunpack.c.l.b16 %v29
  %v77 = vunpack.c.l.b16 %v30
  %v78 = vunpack.c.l.b16 %v31
  %v79 = vunpack.c.l.b16 %v32
  %v80 = vunpack.c.l.b16 %v33
  %v81 = vunpack.c.l.b16 %v34
  %v82 = vunpack.c.l.b16 %v35
  %v83 = vunpack.c.l.b16 %v36
  %v84 = vunpack.c.l.b16 %v37
  %v85 = vunpack.c.l.b16 %v38
  %v86 = vpack.c.b16 %v71, %v70
  %v87 = vpack.c.b16 %v73, %v72
  %v88 = vpack.c.b16 %v75, %v74
  %v89 = vpack.c.b16 %v77, %v76
  %v90 = vpack.c.b16 %v79, %v78
  %v91 = vpack.c.b16 %v81, %v80
  %v92 = vpack.c.b16 %v83, %v82
  %v93 = vpack.c.b16 %v85, %v84
  %v102 = vunpack.c.l.b16 %v39
  %v103 = vunpack.c.l.b16 %v40
  %v104 = vunpack.c.l.b16 %v41
  %v105 = vunpack.c.l.b16 %v42
  %v106 = vunpack.c.l.b16 %v43
  %v107 = vunpack.c.l.b16 %v44
  %v108 = vunpack.c.l.b16 %v45
  %v109 = vunpack.c.l.b16 %v46
  %v110 = vpack.c.b16 %v103, %v102
  %v111 = vpack.c.b16 %v105, %v104
  %v112 = vpack.c.b16 %v107, %v106
  %v113 = vpack.c.b16 %v109, %v108
  %vm118 = vcmask 523264
  %v120 = vsel %vm118, %v86, 0
  %v123 = vsel %vm118, %v87, 0
  %v126 = vsel %vm118, %v88, 0
  %v129 = vsel %vm118, %v89, 0
  %v132 = vsel %vm118, %v90, 0
  %v135 = vsel %vm118, %v91, 0
  %v138 = vsel %vm118, %v92, 0
  %v141 = vsel %vm118, %v93, 0
  %143 = vmatprep.subr.bf16.mxu0 0
  %144 = vmatpush1.bf16.msra.mxu0 %v110
  %145 = vmatprep.subr.bf16.mxu0 0
  %146 = vmatpush1.bf16.msra.mxu0 %v111
  %147 = vmatprep.subr.bf16.mxu0 0
  %148 = vmatpush1.bf16.msra.mxu0 %v112
  %149 = vmatprep.subr.bf16.mxu0 0
  %150 = vmatpush1.bf16.msra.mxu0 %v113
  %151 = vmatprep.subr.bf16.mxu0 0
  %152 = vmatpush1.bf16.msra.mxu0 0
  %153 = vmatprep.subr.bf16.mxu0 0
  %154 = vmatpush1.bf16.msra.mxu0 0
  %155 = vmatprep.subr.bf16.mxu0 0
  %156 = vmatpush1.bf16.msra.mxu0 0
  %157 = vmatprep.subr.bf16.mxu0 0
  %158 = vmatpush1.bf16.msra.mxu0 0
  %159 = vmatprep.subr.bf16.mxu0 0
  %160 = vmatpush1.bf16.msra.mxu0 0
  %161 = vmatprep.subr.bf16.mxu0 0
  %162 = vmatpush1.bf16.msra.mxu0 0
  %163 = vmatprep.subr.bf16.mxu0 0
  %164 = vmatpush1.bf16.msra.mxu0 0
  %165 = vmatprep.subr.bf16.mxu0 0
  %166 = vmatpush1.bf16.msra.mxu0 0
  %167 = vmatprep.subr.bf16.mxu0 0
  %168 = vmatpush1.bf16.msra.mxu0 0
  %169 = vmatprep.subr.bf16.mxu0 0
  %170 = vmatpush1.bf16.msra.mxu0 0
  %171 = vmatprep.subr.bf16.mxu0 0
  %172 = vmatpush1.bf16.msra.mxu0 0
  %173 = vmatprep.subr.bf16.mxu0 0
  %174 = vmatpush1.bf16.msra.mxu0 0
  %175 = vmatprep.mubr.bf16.mxu0 0
  %176 = vmatmul.mubr.bf16.gmra.mrb[0].mxu0 %v120
  %v177 = vpop.f32.mrb[0].mxu0
  %v178 = vadd.f32 %v52, %v177
  %v179 = vpop.f32.mrb[0].mxu0
  %v180 = vpop.f32.mrb[0].mxu0
  %v181 = vadd.f32 %v52, %v180
  %v182 = vpop.f32.mrb[0].mxu0
  %183 = vmatprep.mubr.bf16.mxu0 0
  %184 = vmatmul.mubr.bf16.gmra.mrb[0].mxu0 %v123
  %v185 = vpop.f32.mrb[0].mxu0
  %v186 = vadd.f32 %v52, %v185
  %v187 = vpop.f32.mrb[0].mxu0
  %v188 = vpop.f32.mrb[0].mxu0
  %v189 = vadd.f32 %v52, %v188
  %v190 = vpop.f32.mrb[0].mxu0
  %191 = vmatprep.mubr.bf16.mxu0 0
  %192 = vmatmul.mubr.bf16.gmra.mrb[0].mxu0 %v126
  %v193 = vpop.f32.mrb[0].mxu0
  %v194 = vadd.f32 %v52, %v193
  %v195 = vpop.f32.mrb[0].mxu0
  %v196 = vpop.f32.mrb[0].mxu0
  %v197 = vadd.f32 %v52, %v196
  %v198 = vpop.f32.mrb[0].mxu0
  %199 = vmatprep.mubr.bf16.mxu0 0
  %200 = vmatmul.mubr.bf16.gmra.mrb[0].mxu0 %v129
  %v201 = vpop.f32.mrb[0].mxu0
  %v202 = vadd.f32 %v52, %v201
  %v203 = vpop.f32.mrb[0].mxu0
  %v204 = vpop.f32.mrb[0].mxu0
  %v205 = vadd.f32 %v52, %v204
  %v206 = vpop.f32.mrb[0].mxu0
  %207 = vmatprep.mubr.bf16.mxu0 0
  %208 = vmatmul.mubr.bf16.gmra.mrb[0].mxu0 %v132
  %v209 = vpop.f32.mrb[0].mxu0
  %v210 = vadd.f32 %v52, %v209
  %v211 = vpop.f32.mrb[0].mxu0
  %v212 = vpop.f32.mrb[0].mxu0
  %v213 = vadd.f32 %v52, %v212
  %v214 = vpop.f32.mrb[0].mxu0
  %215 = vmatprep.mubr.bf16.mxu0 0
  %216 = vmatmul.mubr.bf16.gmra.mrb[0].mxu0 %v135
  %v217 = vpop.f32.mrb[0].mxu0
  %v218 = vadd.f32 %v52, %v217
  %v219 = vpop.f32.mrb[0].mxu0
  %v220 = vpop.f32.mrb[0].mxu0
  %v221 = vadd.f32 %v52, %v220
  %v222 = vpop.f32.mrb[0].mxu0
  %223 = vmatprep.mubr.bf16.mxu0 0
  %224 = vmatmul.mubr.bf16.gmra.mrb[0].mxu0 %v138
  %v225 = vpop.f32.mrb[0].mxu0
  %v226 = vadd.f32 %v52, %v225
  %v227 = vpop.f32.mrb[0].mxu0
  %v228 = vpop.f32.mrb[0].mxu0
  %v229 = vadd.f32 %v52, %v228
  %v230 = vpop.f32.mrb[0].mxu0
  %231 = vmatprep.mubr.bf16.mxu0 0
  %232 = vmatmul.mubr.bf16.gmra.mrb[0].mxu0 %v141
  %v233 = vpop.f32.mrb[0].mxu0
  %v234 = vadd.f32 %v52, %v233
  %v235 = vpop.f32.mrb[0].mxu0
  %v236 = vpop.f32.mrb[0].mxu0
  %v237 = vadd.f32 %v52, %v236
  %v238 = vpop.f32.mrb[0].mxu0
  %239 = vdwg.mxu0
  %v240 = vld [vmem:[%s3] sm:$0xf]
  %v241 = vld [vmem:[%s3 + $0x4] sm:$0xf]
  %v242 = vld [vmem:[%s3 + $0x8] sm:$0xf]
  %v243 = vld [vmem:[%s3 + $0xc] sm:$0xf]
  %v244 = vld [vmem:[%s3 + $0x10] sm:$0xf]
  %v245 = vld [vmem:[%s3 + $0x14] sm:$0xf]
  %v246 = vld [vmem:[%s3 + $0x18] sm:$0xf]
  %v247 = vld [vmem:[%s3 + $0x1c] sm:$0xf]
  %v248 = vld [vmem:[%s4] sm:$0x1]
  %249 = vxpose.xlu0.b32.start [1/16] %v178, 128
  %250 = vxpose.xlu0.b32.cont [2/16] %v181, 128
  %251 = vxpose.xlu0.b32.cont [3/16] %v186, 128
  %252 = vxpose.xlu0.b32.cont [4/16] %v189, 128
  %253 = vxpose.xlu0.b32.cont [5/16] %v194, 128
  %254 = vxpose.xlu0.b32.cont [6/16] %v197, 128
  %255 = vxpose.xlu0.b32.cont [7/16] %v202, 128
  %256 = vxpose.xlu0.b32.cont [8/16] %v205, 128
  %257 = vxpose.xlu0.b32.cont [9/16] 0.0, 128
  %258 = vxpose.xlu0.b32.cont [10/16] 0.0, 128
  %259 = vxpose.xlu0.b32.cont [11/16] 0.0, 128
  %260 = vxpose.xlu0.b32.cont [12/16] 0.0, 128
  %261 = vxpose.xlu0.b32.cont [13/16] 0.0, 128
  %262 = vxpose.xlu0.b32.cont [14/16] 0.0, 128
  %263 = vxpose.xlu0.b32.cont [15/16] 0.0, 128
  %264 = vxpose.xlu0.b32.end [16/16] 0.0, 128
  %v265 = vpop.trf.xlu0
  %v266 = vpop.trf.xlu0
  %v267 = vpop.trf.xlu0
  %v268 = vpop.trf.xlu0
  %v269 = vpop.trf.xlu0
  %v270 = vpop.trf.xlu0
  %v271 = vpop.trf.xlu0
  %v272 = vpop.trf.xlu0
  %v273 = vpop.trf.xlu0
  %v274 = vpop.trf.xlu0
  %v275 = vpop.trf.xlu0
  %v276 = vpop.trf.xlu0
  %v277 = vpop.trf.xlu0
  %v278 = vpop.trf.xlu0
  %v279 = vpop.trf.xlu0
  %v280 = vpop.trf.xlu0
  %281 = vxpose.xlu0.b32.start [1/16] %v210, 128
  %282 = vxpose.xlu0.b32.cont [2/16] %v213, 128
  %283 = vxpose.xlu0.b32.cont [3/16] %v218, 128
  %284 = vxpose.xlu0.b32.cont [4/16] %v221, 128
  %285 = vxpose.xlu0.b32.cont [5/16] %v226, 128
  %286 = vxpose.xlu0.b32.cont [6/16] %v229, 128
  %287 = vxpose.xlu0.b32.cont [7/16] %v234, 128
  %288 = vxpose.xlu0.b32.cont [8/16] %v237, 128
  %289 = vxpose.xlu0.b32.cont [9/16] 0.0, 128
  %290 = vxpose.xlu0.b32.cont [10/16] 0.0, 128
  %291 = vxpose.xlu0.b32.cont [11/16] 0.0, 128
  %292 = vxpose.xlu0.b32.cont [12/16] 0.0, 128
  %293 = vxpose.xlu0.b32.cont [13/16] 0.0, 128
  %294 = vxpose.xlu0.b32.cont [14/16] 0.0, 128
  %295 = vxpose.xlu0.b32.cont [15/16] 0.0, 128
  %296 = vxpose.xlu0.b32.end [16/16] 0.0, 128
  %v297 = vpop.trf.xlu0
  %v298 = vpop.trf.xlu0
  %v299 = vpop.trf.xlu0
  %v300 = vpop.trf.xlu0
  %v301 = vpop.trf.xlu0
  %v302 = vpop.trf.xlu0
  %v303 = vpop.trf.xlu0
  %v304 = vpop.trf.xlu0
  %v305 = vpop.trf.xlu0
  %v306 = vpop.trf.xlu0
  %v307 = vpop.trf.xlu0
  %v308 = vpop.trf.xlu0
  %v309 = vpop.trf.xlu0
  %v310 = vpop.trf.xlu0
  %v311 = vpop.trf.xlu0
  %v312 = vpop.trf.xlu0
  %vm319 = vcmask 1041408
  %v320 = vrot.slane %v297, 6
  %v321 = vrot.slane %v298, 6
  %v322 = vsel %vm319, %v320, %v321
  %v323 = vrot.slane %v299, 6
  %v324 = vsel %vm319, %v321, %v323
  %v325 = vrot.slane %v300, 6
  %v326 = vsel %vm319, %v323, %v325
  %v327 = vrot.slane %v301, 6
  %v328 = vsel %vm319, %v325, %v327
  %v329 = vrot.slane %v302, 6
  %v330 = vsel %vm319, %v327, %v329
  %v337 = vsel %vm319, %v270, %v320
  %v338 = vpack.c.bf16 %v266, %v265
  %v339 = vpack.c.bf16 %v268, %v267
  %v340 = vpack.c.bf16 %v337, %v269
  %v341 = vpack.c.bf16 %v324, %v322
  %v342 = vpack.c.bf16 %v328, %v326
  %v343 = vpack.c.bf16 %v330, %v330
  %v345 = vlaneseq
  %v346 = vshrl.u32 %v345, 7
  %v347 = vsub.s32 0, %v346
  %v348 = vrot.slane %v248, %v347
  %v358 = vunpack.c.l.b16 %v240
  %v359 = vunpack.c.l.b16 %v241
  %v360 = vunpack.c.l.b16 %v242
  %v361 = vunpack.c.l.b16 %v243
  %v362 = vunpack.c.l.b16 %v244
  %v363 = vunpack.c.l.b16 %v245
  %v364 = vunpack.c.l.b16 %v246
  %v365 = vunpack.c.l.b16 %v247
  %v366 = vpack.c.b16 %v359, %v358
  %v367 = vpack.c.b16 %v361, %v360
  %v368 = vpack.c.b16 %v363, %v362
  %v369 = vpack.c.b16 %v365, %v364
  %v375 = vsel %vm118, %v338, 0
  %v378 = vsel %vm118, %v339, 0
  %v381 = vsel %vm118, %v340, 0
  %v384 = vsel %vm118, %v341, 0
  %v387 = vsel %vm118, %v342, 0
  %v390 = vsel %vm118, %v343, 0
  %392 = vmatprep.subr.bf16.mxu0 0
  %393 = vmatpush1.bf16.msra.mxu0 %v366
  %394 = vmatprep.subr.bf16.mxu0 0
  %395 = vmatpush1.bf16.msra.mxu0 %v367
  %396 = vmatprep.subr.bf16.mxu0 0
  %397 = vmatpush1.bf16.msra.mxu0 %v368
  %398 = vmatprep.subr.bf16.mxu0 0
  %399 = vmatpush1.bf16.msra.mxu0 %v369
  %400 = vmatprep.subr.bf16.mxu0 0
  %401 = vmatpush1.bf16.msra.mxu0 0
  %402 = vmatprep.subr.bf16.mxu0 0
  %403 = vmatpush1.bf16.msra.mxu0 0
  %404 = vmatprep.subr.bf16.mxu0 0
  %405 = vmatpush1.bf16.msra.mxu0 0
  %406 = vmatprep.subr.bf16.mxu0 0
  %407 = vmatpush1.bf16.msra.mxu0 0
  %408 = vmatprep.subr.bf16.mxu0 0
  %409 = vmatpush1.bf16.msra.mxu0 0
  %410 = vmatprep.subr.bf16.mxu0 0
  %411 = vmatpush1.bf16.msra.mxu0 0
  %412 = vmatprep.subr.bf16.mxu0 0
  %413 = vmatpush1.bf16.msra.mxu0 0
  %414 = vmatprep.subr.bf16.mxu0 0
  %415 = vmatpush1.bf16.msra.mxu0 0
  %416 = vmatprep.subr.bf16.mxu0 0
  %417 = vmatpush1.bf16.msra.mxu0 0
  %418 = vmatprep.subr.bf16.mxu0 0
  %419 = vmatpush1.bf16.msra.mxu0 0
  %420 = vmatprep.subr.bf16.mxu0 0
  %421 = vmatpush1.bf16.msra.mxu0 0
  %422 = vmatprep.subr.bf16.mxu0 0
  %423 = vmatpush1.bf16.msra.mxu0 0
  %424 = vmatprep.mubr.bf16.mxu0 0
  %425 = vmatmul.mubr.bf16.gmra.mrb[0].mxu0 %v375
  %v426 = vpop.f32.mrb[0].mxu0
  %v427 = vadd.f32 %v348, %v426
  %v428 = vpop.f32.mrb[0].mxu0
  %v429 = vpop.f32.mrb[0].mxu0
  %v430 = vadd.f32 %v348, %v429
  %v431 = vpop.f32.mrb[0].mxu0
  %432 = vmatprep.mubr.bf16.mxu0 0
  %433 = vmatmul.mubr.bf16.gmra.mrb[0].mxu0 %v378
  %v434 = vpop.f32.mrb[0].mxu0
  %v435 = vadd.f32 %v348, %v434
  %v436 = vpop.f32.mrb[0].mxu0
  %v437 = vpop.f32.mrb[0].mxu0
  %v438 = vadd.f32 %v348, %v437
  %v439 = vpop.f32.mrb[0].mxu0
  %440 = vmatprep.mubr.bf16.mxu0 0
  %441 = vmatmul.mubr.bf16.gmra.mrb[0].mxu0 %v381
  %v442 = vpop.f32.mrb[0].mxu0
  %v443 = vadd.f32 %v348, %v442
  %v444 = vpop.f32.mrb[0].mxu0
  %v445 = vpop.f32.mrb[0].mxu0
  %v446 = vadd.f32 %v348, %v445
  %v447 = vpop.f32.mrb[0].mxu0
  %448 = vmatprep.mubr.bf16.mxu0 0
  %449 = vmatmul.mubr.bf16.gmra.mrb[0].mxu0 %v384
  %v450 = vpop.f32.mrb[0].mxu0
  %v451 = vadd.f32 %v348, %v450
  %v452 = vpop.f32.mrb[0].mxu0
  %v453 = vpop.f32.mrb[0].mxu0
  %v454 = vadd.f32 %v348, %v453
  %v455 = vpop.f32.mrb[0].mxu0
  %456 = vmatprep.mubr.bf16.mxu0 0
  %457 = vmatmul.mubr.bf16.gmra.mrb[0].mxu0 %v387
  %v458 = vpop.f32.mrb[0].mxu0
  %v459 = vadd.f32 %v348, %v458
  %v460 = vpop.f32.mrb[0].mxu0
  %v461 = vpop.f32.mrb[0].mxu0
  %v462 = vadd.f32 %v348, %v461
  %v463 = vpop.f32.mrb[0].mxu0
  %464 = vmatprep.mubr.bf16.mxu0 0
  %465 = vmatmul.mubr.bf16.gmra.mrb[0].mxu0 %v390
  %v466 = vpop.f32.mrb[0].mxu0
  %v467 = vadd.f32 %v348, %v466
  %v468 = vpop.f32.mrb[0].mxu0
  %v469 = vpop.f32.mrb[0].mxu0
  %v470 = vpop.f32.mrb[0].mxu0
  %471 = vdwg.mxu0
  %472 = vst [vmem:[%s5] sm:$0xff] %v427
  %473 = vst [vmem:[%s5 + $0x8] sm:$0xff] %v430
  %474 = vst [vmem:[%s5 + $0x10] sm:$0xff] %v435
  %475 = vst [vmem:[%s5 + $0x18] sm:$0xff] %v438
  %476 = vst [vmem:[%s5 + $0x20] sm:$0xff] %v443
  %477 = vst [vmem:[%s5 + $0x28] sm:$0xff] %v446
  %478 = vst [vmem:[%s5 + $0x30] sm:$0xff] %v451
  %479 = vst [vmem:[%s5 + $0x38] sm:$0xff] %v454
  %480 = vst [vmem:[%s5 + $0x40] sm:$0xff] %v459
  %481 = vst [vmem:[%s5 + $0x48] sm:$0xff] %v462
  %482 = vst [vmem:[%s5 + $0x50] sm:$0xf] %v467
  %483 = vst.msk [vmem:[%s6] sm:$0xff] %vm118, %v273
  %484 = vst.msk [vmem:[%s6 + $0x8] sm:$0xff] %vm118, %v274
  %485 = vst.msk [vmem:[%s6 + $0x10] sm:$0xff] %vm118, %v275
  %486 = vst.msk [vmem:[%s6 + $0x18] sm:$0xff] %vm118, %v276
  %487 = vst.msk [vmem:[%s6 + $0x20] sm:$0xff] %vm118, %v277
  %488 = vst.msk [vmem:[%s6 + $0x28] sm:$0xff] %vm118, %v305
  %489 = vst.msk [vmem:[%s6 + $0x30] sm:$0xff] %vm118, %v306
  %490 = vst.msk [vmem:[%s6 + $0x38] sm:$0xff] %vm118, %v307
  %491 = vst.msk [vmem:[%s6 + $0x40] sm:$0xff] %vm118, %v308
  %492 = vst.msk [vmem:[%s6 + $0x48] sm:$0xff] %vm118, %v309
  // Predicated region
  $region22: #{model_forward.7} parent=0 // pred_check
    _
  $region23: #{model_forward.7} parent=0 // pred_check_branch
    %494 = sbr.rel (0) target = $region25
  $region24: #{model_forward.7} parent=0 // pred_region
    _
  $region25: #{model_forward.7} parent=0 // pred_fallthru
    _
  // Predicated region
  $region26: #{model_forward.7} parent=0 // pred_check
    _
  $region27: #{model_forward.7} parent=0 // pred_check_branch
    %496 = sbr.rel (0) target = $region29
  $region28: #{model_forward.7} parent=0 // pred_region
    _
  $region29: #{model_forward.7} parent=0 // pred_fallthru
    _
  // Predicated region
  $region30: #{model_forward.7} parent=0 // pred_check
    _
  $region31: #{model_forward.7} parent=0 // pred_check_branch
    %498 = sbr.rel (0) target = $region33
  $region32: #{model_forward.7} parent=0 // pred_region
    _
  $region33: #{model_forward.7} parent=0 // pred_fallthru
    _
  // Predicated region
  $region34: #{model_forward.7} parent=0 // pred_check
    _
  $region35: #{model_forward.7} parent=0 // pred_check_branch
    %500 = sbr.rel (0) target = $region37
  $region36: #{model_forward.7} parent=0 // pred_region
    _
  $region37: #{model_forward.7} parent=0 // pred_fallthru
    _

// kernel: model_forward.6
$region0: #{model_forward.6}
  #allocation0 [shape = 'u32[]', space=smem, size = 0x4, offset = 0x4, fixed_abs, tag = 'smem constant byte address 0x4 - core index']
  #allocation1 [shape = 'u32[144,128]{1,0:T(1,128)}', space=vmem, size = 0x12000, scoped, tag = 'internal scratch']
  %s0 = inlined_call_operand.vmem [shape: bf16[128,64], index: 0, kind: input, shape index: {}]
  %s1 = inlined_call_operand.vmem [shape: bf16[64,128], index: 1, kind: input, shape index: {}]
  %s2 = inlined_call_operand.vmem [shape: f32[1,128], index: 2, kind: input, shape index: {}]
  %s3 = inlined_call_operand.vmem [shape: bf16[64,128], index: 3, kind: input, shape index: {}]
  %s4 = inlined_call_operand.vmem [shape: f32[1,128], index: 4, kind: input, shape index: {}]
  %s5 = inlined_call_operand.vmem [shape: f32[42,128], index: 5, kind: output, shape index: {0}]
  %s6 = inlined_call_operand.vmem [shape: f32[40,64], index: 6, kind: output, shape index: {1}]
  %7 = xla_tuple %s5, %s6
  %s8 = sld [smem:[#allocation0]]
  $region38: #{model_forward.6} parent=0
    _
  %s10 = ssub.s32 1, %s8
  %s11 = scalar_select 0, %s10, %s8
  // Predicated region
  $region2: #{model_forward.6} parent=0 // pred_check
    _
  $region3: #{model_forward.6} parent=0 // pred_check_branch
    %13 = sbr.rel (0) target = $region5
  $region4: #{model_forward.6} parent=0 // pred_region
    _
  $region5: #{model_forward.6} parent=0 // pred_fallthru
    _
  // Predicated region
  $region6: #{model_forward.6} parent=0 // pred_check
    _
  $region7: #{model_forward.6} parent=0 // pred_check_branch
    %15 = sbr.rel (0) target = $region9
  $region8: #{model_forward.6} parent=0 // pred_region
    _
  $region9: #{model_forward.6} parent=0 // pred_fallthru
    _
  // Predicated region
  $region10: #{model_forward.6} parent=0 // pred_check
    _
  $region11: #{model_forward.6} parent=0 // pred_check_branch
    %17 = sbr.rel (0) target = $region13
  $region12: #{model_forward.6} parent=0 // pred_region
    _
  $region13: #{model_forward.6} parent=0 // pred_fallthru
    _
  // Predicated region
  $region14: #{model_forward.6} parent=0 // pred_check
    _
  $region15: #{model_forward.6} parent=0 // pred_check_branch
    %19 = sbr.rel (0) target = $region17
  $region16: #{model_forward.6} parent=0 // pred_region
    _
  $region17: #{model_forward.6} parent=0 // pred_fallthru
    _
  // Predicated region
  $region18: #{model_forward.6} parent=0 // pred_check
    _
  $region19: #{model_forward.6} parent=0 // pred_check_branch
    %21 = sbr.rel (0) target = $region21
  $region20: #{model_forward.6} parent=0 // pred_region
    _
  $region21: #{model_forward.6} parent=0 // pred_fallthru
    _
  %v23 = vld [vmem:[%s0] sm:$0xf]
  %v24 = vld [vmem:[%s0 + $0x4] sm:$0xf]
  %v25 = vld [vmem:[%s0 + $0x8] sm:$0xf]
  %v26 = vld [vmem:[%s0 + $0xc] sm:$0xf]
  %v27 = vld [vmem:[%s0 + $0x10] sm:$0xf]
  %v28 = vld [vmem:[%s0 + $0x14] sm:$0xf]
  %v29 = vld [vmem:[%s0 + $0x18] sm:$0xf]
  %v30 = vld [vmem:[%s0 + $0x1c] sm:$0xf]
  %v31 = vld [vmem:[%s0 + $0x20] sm:$0xf]
  %v32 = vld [vmem:[%s0 + $0x24] sm:$0xf]
  %v33 = vld [vmem:[%s0 + $0x28] sm:$0xf]
  %v34 = vld [vmem:[%s0 + $0x2c] sm:$0xf]
  %v35 = vld [vmem:[%s0 + $0x30] sm:$0xf]
  %v36 = vld [vmem:[%s0 + $0x34] sm:$0xf]
  %v37 = vld [vmem:[%s0 + $0x38] sm:$0xf]
  %v38 = vld [vmem:[%s0 + $0x3c] sm:$0xf]
  %v39 = vld [vmem:[%s1] sm:$0xf]
  %v40 = vld [vmem:[%s1 + $0x4] sm:$0xf]
  %v41 = vld [vmem:[%s1 + $0x8] sm:$0xf]
  %v42 = vld [vmem:[%s1 + $0xc] sm:$0xf]
  %v43 = vld [vmem:[%s1 + $0x10] sm:$0xf]
  %v44 = vld [vmem:[%s1 + $0x14] sm:$0xf]
  %v45 = vld [vmem:[%s1 + $0x18] sm:$0xf]
  %v46 = vld [vmem:[%s1 + $0x1c] sm:$0xf]
  %v47 = vld [vmem:[%s2] sm:$0x1]
  %v49 = vlaneseq
  %v50 = vshrl.u32 %v49, 7
  %v51 = vsub.s32 0, %v50
  %v52 = vrot.slane %v47, %v51
  %v70 = vunpack.c.l.b16 %v23
  %v71 = vunpack.c.l.b16 %v24
  %v72 = vunpack.c.l.b16 %v25
  %v73 = vunpack.c.l.b16 %v26
  %v74 = vunpack.c.l.b16 %v27
  %v75 = vunpack.c.l.b16 %v28
  %v76 = vunpack.c.l.b16 %v29
  %v77 = vunpack.c.l.b16 %v30
  %v78 = vunpack.c.l.b16 %v31
  %v79 = vunpack.c.l.b16 %v32
  %v80 = vunpack.c.l.b16 %v33
  %v81 = vunpack.c.l.b16 %v34
  %v82 = vunpack.c.l.b16 %v35
  %v83 = vunpack.c.l.b16 %v36
  %v84 = vunpack.c.l.b16 %v37
  %v85 = vunpack.c.l.b16 %v38
  %v86 = vpack.c.b16 %v71, %v70
  %v87 = vpack.c.b16 %v73, %v72
  %v88 = vpack.c.b16 %v75, %v74
  %v89 = vpack.c.b16 %v77, %v76
  %v90 = vpack.c.b16 %v79, %v78
  %v91 = vpack.c.b16 %v81, %v80
  %v92 = vpack.c.b16 %v83, %v82
  %v93 = vpack.c.b16 %v85, %v84
  %v102 = vunpack.c.l.b16 %v39
  %v103 = vunpack.c.l.b16 %v40
  %v104 = vunpack.c.l.b16 %v41
  %v105 = vunpack.c.l.b16 %v42
  %v106 = vunpack.c.l.b16 %v43
  %v107 = vunpack.c.l.b16 %v44
  %v108 = vunpack.c.l.b16 %v45
  %v109 = vunpack.c.l.b16 %v46
  %v110 = vpack.c.b16 %v103, %v102
  %v111 = vpack.c.b16 %v105, %v104
  %v112 = vpack.c.b16 %v107, %v106
  %v113 = vpack.c.b16 %v109, %v108
  %vm118 = vcmask 523264
  %v120 = vsel %vm118, %v86, 0
  %v123 = vsel %vm118, %v87, 0
  %v126 = vsel %vm118, %v88, 0
  %v129 = vsel %vm118, %v89, 0
  %v132 = vsel %vm118, %v90, 0
  %v135 = vsel %vm118, %v91, 0
  %v138 = vsel %vm118, %v92, 0
  %v141 = vsel %vm118, %v93, 0
  %143 = vmatprep.subr.bf16.mxu0 0
  %144 = vmatpush1.bf16.msra.mxu0 %v110
  %145 = vmatprep.subr.bf16.mxu0 0
  %146 = vmatpush1.bf16.msra.mxu0 %v111
  %147 = vmatprep.subr.bf16.mxu0 0
  %148 = vmatpush1.bf16.msra.mxu0 %v112
  %149 = vmatprep.subr.bf16.mxu0 0
  %150 = vmatpush1.bf16.msra.mxu0 %v113
  %151 = vmatprep.subr.bf16.mxu0 0
  %152 = vmatpush1.bf16.msra.mxu0 0
  %153 = vmatprep.subr.bf16.mxu0 0
  %154 = vmatpush1.bf16.msra.mxu0 0
  %155 = vmatprep.subr.bf16.mxu0 0
  %156 = vmatpush1.bf16.msra.mxu0 0
  %157 = vmatprep.subr.bf16.mxu0 0
  %158 = vmatpush1.bf16.msra.mxu0 0
  %159 = vmatprep.subr.bf16.mxu0 0
  %160 = vmatpush1.bf16.msra.mxu0 0
  %161 = vmatprep.subr.bf16.mxu0 0
  %162 = vmatpush1.bf16.msra.mxu0 0
  %163 = vmatprep.subr.bf16.mxu0 0
  %164 = vmatpush1.bf16.msra.mxu0 0
  %165 = vmatprep.subr.bf16.mxu0 0
  %166 = vmatpush1.bf16.msra.mxu0 0
  %167 = vmatprep.subr.bf16.mxu0 0
  %168 = vmatpush1.bf16.msra.mxu0 0
  %169 = vmatprep.subr.bf16.mxu0 0
  %170 = vmatpush1.bf16.msra.mxu0 0
  %171 = vmatprep.subr.bf16.mxu0 0
  %172 = vmatpush1.bf16.msra.mxu0 0
  %173 = vmatprep.subr.bf16.mxu0 0
  %174 = vmatpush1.bf16.msra.mxu0 0
  %175 = vmatprep.mubr.bf16.mxu0 0
  %176 = vmatmul.mubr.bf16.gmra.mrb[0].mxu0 %v120
  %v177 = vpop.f32.mrb[0].mxu0
  %v178 = vadd.f32 %v52, %v177
  %v179 = vpop.f32.mrb[0].mxu0
  %v180 = vpop.f32.mrb[0].mxu0
  %v181 = vadd.f32 %v52, %v180
  %v182 = vpop.f32.mrb[0].mxu0
  %183 = vmatprep.mubr.bf16.mxu0 0
  %184 = vmatmul.mubr.bf16.gmra.mrb[0].mxu0 %v123
  %v185 = vpop.f32.mrb[0].mxu0
  %v186 = vadd.f32 %v52, %v185
  %v187 = vpop.f32.mrb[0].mxu0
  %v188 = vpop.f32.mrb[0].mxu0
  %v189 = vadd.f32 %v52, %v188
  %v190 = vpop.f32.mrb[0].mxu0
  %191 = vmatprep.mubr.bf16.mxu0 0
  %192 = vmatmul.mubr.bf16.gmra.mrb[0].mxu0 %v126
  %v193 = vpop.f32.mrb[0].mxu0
  %v194 = vadd.f32 %v52, %v193
  %v195 = vpop.f32.mrb[0].mxu0
  %v196 = vpop.f32.mrb[0].mxu0
  %v197 = vadd.f32 %v52, %v196
  %v198 = vpop.f32.mrb[0].mxu0
  %199 = vmatprep.mubr.bf16.mxu0 0
  %200 = vmatmul.mubr.bf16.gmra.mrb[0].mxu0 %v129
  %v201 = vpop.f32.mrb[0].mxu0
  %v202 = vadd.f32 %v52, %v201
  %v203 = vpop.f32.mrb[0].mxu0
  %v204 = vpop.f32.mrb[0].mxu0
  %v205 = vadd.f32 %v52, %v204
  %v206 = vpop.f32.mrb[0].mxu0
  %207 = vmatprep.mubr.bf16.mxu0 0
  %208 = vmatmul.mubr.bf16.gmra.mrb[0].mxu0 %v132
  %v209 = vpop.f32.mrb[0].mxu0
  %v210 = vadd.f32 %v52, %v209
  %v211 = vpop.f32.mrb[0].mxu0
  %v212 = vpop.f32.mrb[0].mxu0
  %v213 = vadd.f32 %v52, %v212
  %v214 = vpop.f32.mrb[0].mxu0
  %215 = vmatprep.mubr.bf16.mxu0 0
  %216 = vmatmul.mubr.bf16.gmra.mrb[0].mxu0 %v135
  %v217 = vpop.f32.mrb[0].mxu0
  %v218 = vadd.f32 %v52, %v217
  %v219 = vpop.f32.mrb[0].mxu0
  %v220 = vpop.f32.mrb[0].mxu0
  %v221 = vadd.f32 %v52, %v220
  %v222 = vpop.f32.mrb[0].mxu0
  %223 = vmatprep.mubr.bf16.mxu0 0
  %224 = vmatmul.mubr.bf16.gmra.mrb[0].mxu0 %v138
  %v225 = vpop.f32.mrb[0].mxu0
  %v226 = vadd.f32 %v52, %v225
  %v227 = vpop.f32.mrb[0].mxu0
  %v228 = vpop.f32.mrb[0].mxu0
  %v229 = vadd.f32 %v52, %v228
  %v230 = vpop.f32.mrb[0].mxu0
  %231 = vmatprep.mubr.bf16.mxu0 0
  %232 = vmatmul.mubr.bf16.gmra.mrb[0].mxu0 %v141
  %v233 = vpop.f32.mrb[0].mxu0
  %v234 = vadd.f32 %v52, %v233
  %v235 = vpop.f32.mrb[0].mxu0
  %v236 = vpop.f32.mrb[0].mxu0
  %v237 = vadd.f32 %v52, %v236
  %v238 = vpop.f32.mrb[0].mxu0
  %239 = vdwg.mxu0
  %v240 = vld [vmem:[%s3] sm:$0xf]
  %v241 = vld [vmem:[%s3 + $0x4] sm:$0xf]
  %v242 = vld [vmem:[%s3 + $0x8] sm:$0xf]
  %v243 = vld [vmem:[%s3 + $0xc] sm:$0xf]
  %v244 = vld [vmem:[%s3 + $0x10] sm:$0xf]
  %v245 = vld [vmem:[%s3 + $0x14] sm:$0xf]
  %v246 = vld [vmem:[%s3 + $0x18] sm:$0xf]
  %v247 = vld [vmem:[%s3 + $0x1c] sm:$0xf]
  %v248 = vld [vmem:[%s4] sm:$0x1]
  %249 = vxpose.xlu0.b32.start [1/16] %v178, 128
  %250 = vxpose.xlu0.b32.cont [2/16] %v181, 128
  %251 = vxpose.xlu0.b32.cont [3/16] %v186, 128
  %252 = vxpose.xlu0.b32.cont [4/16] %v189, 128
  %253 = vxpose.xlu0.b32.cont [5/16] %v194, 128
  %254 = vxpose.xlu0.b32.cont [6/16] %v197, 128
  %255 = vxpose.xlu0.b32.cont [7/16] %v202, 128
  %256 = vxpose.xlu0.b32.cont [8/16] %v205, 128
  %257 = vxpose.xlu0.b32.cont [9/16] 0.0, 128
  %258 = vxpose.xlu0.b32.cont [10/16] 0.0, 128
  %259 = vxpose.xlu0.b32.cont [11/16] 0.0, 128
  %260 = vxpose.xlu0.b32.cont [12/16] 0.0, 128
  %261 = vxpose.xlu0.b32.cont [13/16] 0.0, 128
  %262 = vxpose.xlu0.b32.cont [14/16] 0.0, 128
  %263 = vxpose.xlu0.b32.cont [15/16] 0.0, 128
  %264 = vxpose.xlu0.b32.end [16/16] 0.0, 128
  %v265 = vpop.trf.xlu0
  %v266 = vpop.trf.xlu0
  %v267 = vpop.trf.xlu0
  %v268 = vpop.trf.xlu0
  %v269 = vpop.trf.xlu0
  %v270 = vpop.trf.xlu0
  %v271 = vpop.trf.xlu0
  %v272 = vpop.trf.xlu0
  %v273 = vpop.trf.xlu0
  %v274 = vpop.trf.xlu0
  %v275 = vpop.trf.xlu0
  %v276 = vpop.trf.xlu0
  %v277 = vpop.trf.xlu0
  %v278 = vpop.trf.xlu0
  %v279 = vpop.trf.xlu0
  %v280 = vpop.trf.xlu0
  %281 = vxpose.xlu0.b32.start [1/16] %v210, 128
  %282 = vxpose.xlu0.b32.cont [2/16] %v213, 128
  %283 = vxpose.xlu0.b32.cont [3/16] %v218, 128
  %284 = vxpose.xlu0.b32.cont [4/16] %v221, 128
  %285 = vxpose.xlu0.b32.cont [5/16] %v226, 128
  %286 = vxpose.xlu0.b32.cont [6/16] %v229, 128
  %287 = vxpose.xlu0.b32.cont [7/16] %v234, 128
  %288 = vxpose.xlu0.b32.cont [8/16] %v237, 128
  %289 = vxpose.xlu0.b32.cont [9/16] 0.0, 128
  %290 = vxpose.xlu0.b32.cont [10/16] 0.0, 128
  %291 = vxpose.xlu0.b32.cont [11/16] 0.0, 128
  %292 = vxpose.xlu0.b32.cont [12/16] 0.0, 128
  %293 = vxpose.xlu0.b32.cont [13/16] 0.0, 128
  %294 = vxpose.xlu0.b32.cont [14/16] 0.0, 128
  %295 = vxpose.xlu0.b32.cont [15/16] 0.0, 128
  %296 = vxpose.xlu0.b32.end [16/16] 0.0, 128
  %v297 = vpop.trf.xlu0
  %v298 = vpop.trf.xlu0
  %v299 = vpop.trf.xlu0
  %v300 = vpop.trf.xlu0
  %v301 = vpop.trf.xlu0
  %v302 = vpop.trf.xlu0
  %v303 = vpop.trf.xlu0
  %v304 = vpop.trf.xlu0
  %v305 = vpop.trf.xlu0
  %v306 = vpop.trf.xlu0
  %v307 = vpop.trf.xlu0
  %v308 = vpop.trf.xlu0
  %v309 = vpop.trf.xlu0
  %v310 = vpop.trf.xlu0
  %v311 = vpop.trf.xlu0
  %v312 = vpop.trf.xlu0
  %vm316 = vcmask 1044480
  %v317 = vrot.slane %v297, 3
  %v318 = vrot.slane %v298, 3
  %v319 = vsel %vm316, %v317, %v318
  %v320 = vrot.slane %v299, 3
  %v321 = vsel %vm316, %v318, %v320
  %v326 = vsel %vm316, %v267, %v317
  %v327 = vpack.c.bf16 %v266, %v265
  %v328 = vpack.c.bf16 %v319, %v326
  %v329 = vpack.c.bf16 %v320, %v321
  %v331 = vlaneseq
  %v332 = vshrl.u32 %v331, 7
  %v333 = vsub.s32 0, %v332
  %v334 = vrot.slane %v248, %v333
  %v344 = vunpack.c.l.b16 %v240
  %v345 = vunpack.c.l.b16 %v241
  %v346 = vunpack.c.l.b16 %v242
  %v347 = vunpack.c.l.b16 %v243
  %v348 = vunpack.c.l.b16 %v244
  %v349 = vunpack.c.l.b16 %v245
  %v350 = vunpack.c.l.b16 %v246
  %v351 = vunpack.c.l.b16 %v247
  %v352 = vpack.c.b16 %v345, %v344
  %v353 = vpack.c.b16 %v347, %v346
  %v354 = vpack.c.b16 %v349, %v348
  %v355 = vpack.c.b16 %v351, %v350
  %v361 = vsel %vm118, %v327, 0
  %v364 = vsel %vm118, %v328, 0
  %v367 = vsel %vm118, %v329, 0
  %369 = vmatprep.subr.bf16.mxu0 0
  %370 = vmatpush1.bf16.msra.mxu0 %v352
  %371 = vmatprep.subr.bf16.mxu0 0
  %372 = vmatpush1.bf16.msra.mxu0 %v353
  %373 = vmatprep.subr.bf16.mxu0 0
  %374 = vmatpush1.bf16.msra.mxu0 %v354
  %375 = vmatprep.subr.bf16.mxu0 0
  %376 = vmatpush1.bf16.msra.mxu0 %v355
  %377 = vmatprep.subr.bf16.mxu0 0
  %378 = vmatpush1.bf16.msra.mxu0 0
  %379 = vmatprep.subr.bf16.mxu0 0
  %380 = vmatpush1.bf16.msra.mxu0 0
  %381 = vmatprep.subr.bf16.mxu0 0
  %382 = vmatpush1.bf16.msra.mxu0 0
  %383 = vmatprep.subr.bf16.mxu0 0
  %384 = vmatpush1.bf16.msra.mxu0 0
  %385 = vmatprep.subr.bf16.mxu0 0
  %386 = vmatpush1.bf16.msra.mxu0 0
  %387 = vmatprep.subr.bf16.mxu0 0
  %388 = vmatpush1.bf16.msra.mxu0 0
  %389 = vmatprep.subr.bf16.mxu0 0
  %390 = vmatpush1.bf16.msra.mxu0 0
  %391 = vmatprep.subr.bf16.mxu0 0
  %392 = vmatpush1.bf16.msra.mxu0 0
  %393 = vmatprep.subr.bf16.mxu0 0
  %394 = vmatpush1.bf16.msra.mxu0 0
  %395 = vmatprep.subr.bf16.mxu0 0
  %396 = vmatpush1.bf16.msra.mxu0 0
  %397 = vmatprep.subr.bf16.mxu0 0
  %398 = vmatpush1.bf16.msra.mxu0 0
  %399 = vmatprep.subr.bf16.mxu0 0
  %400 = vmatpush1.bf16.msra.mxu0 0
  %401 = vmatprep.mubr.bf16.mxu0 0
  %402 = vmatmul.mubr.bf16.gmra.mrb[0].mxu0 %v361
  %v403 = vpop.f32.mrb[0].mxu0
  %v404 = vadd.f32 %v334, %v403
  %v405 = vpop.f32.mrb[0].mxu0
  %v406 = vpop.f32.mrb[0].mxu0
  %v407 = vadd.f32 %v334, %v406
  %v408 = vpop.f32.mrb[0].mxu0
  %409 = vmatprep.mubr.bf16.mxu0 0
  %410 = vmatmul.mubr.bf16.gmra.mrb[0].mxu0 %v364
  %v411 = vpop.f32.mrb[0].mxu0
  %v412 = vadd.f32 %v334, %v411
  %v413 = vpop.f32.mrb[0].mxu0
  %v414 = vpop.f32.mrb[0].mxu0
  %v415 = vadd.f32 %v334, %v414
  %v416 = vpop.f32.mrb[0].mxu0
  %417 = vmatprep.mubr.bf16.mxu0 0
  %418 = vmatmul.mubr.bf16.gmra.mrb[0].mxu0 %v367
  %v419 = vpop.f32.mrb[0].mxu0
  %v420 = vadd.f32 %v334, %v419
  %v421 = vpop.f32.mrb[0].mxu0
  %v422 = vpop.f32.mrb[0].mxu0
  %v423 = vadd.f32 %v334, %v422
  %v424 = vpop.f32.mrb[0].mxu0
  %425 = vdwg.mxu0
  %426 = vst [vmem:[%s5] sm:$0xff] %v404
  %427 = vst [vmem:[%s5 + $0x8] sm:$0xff] %v407
  %428 = vst [vmem:[%s5 + $0x10] sm:$0xff] %v412
  %429 = vst [vmem:[%s5 + $0x18] sm:$0xff] %v415
  %430 = vst [vmem:[%s5 + $0x20] sm:$0xff] %v420
  %431 = vst [vmem:[%s5 + $0x28] sm:$0x3] %v423
  %vm435 = vcmask 1043456
  %v436 = vrot.slane %v305, 4
  %v437 = vrot.slane %v306, 4
  %v438 = vsel %vm435, %v436, %v437
  %v439 = vrot.slane %v307, 4
  %v440 = vsel %vm435, %v437, %v439
  %v444 = vsel %vm435, %v275, %v436
  %445 = vst.msk [vmem:[%s6] sm:$0xff] %vm118, %v273
  %446 = vst.msk [vmem:[%s6 + $0x8] sm:$0xff] %vm118, %v274
  %447 = vst.msk [vmem:[%s6 + $0x10] sm:$0xff] %vm118, %v444
  %448 = vst.msk [vmem:[%s6 + $0x18] sm:$0xff] %vm118, %v438
  %449 = vst.msk [vmem:[%s6 + $0x20] sm:$0xff] %vm118, %v440
  // Predicated region
  $region22: #{model_forward.6} parent=0 // pred_check
    _
  $region23: #{model_forward.6} parent=0 // pred_check_branch
    %451 = sbr.rel (0) target = $region25
  $region24: #{model_forward.6} parent=0 // pred_region
    _
  $region25: #{model_forward.6} parent=0 // pred_fallthru
    _
  // Predicated region
  $region26: #{model_forward.6} parent=0 // pred_check
    _
  $region27: #{model_forward.6} parent=0 // pred_check_branch
    %453 = sbr.rel (0) target = $region29
  $region28: #{model_forward.6} parent=0 // pred_region
    _
  $region29: #{model_forward.6} parent=0 // pred_fallthru
    _
  // Predicated region
  $region30: #{model_forward.6} parent=0 // pred_check
    _
  $region31: #{model_forward.6} parent=0 // pred_check_branch
    %455 = sbr.rel (0) target = $region33
  $region32: #{model_forward.6} parent=0 // pred_region
    _
  $region33: #{model_forward.6} parent=0 // pred_fallthru
    _
  // Predicated region
  $region34: #{model_forward.6} parent=0 // pred_check
    _
  $region35: #{model_forward.6} parent=0 // pred_check_branch
    %457 = sbr.rel (0) target = $region37
  $region36: #{model_forward.6} parent=0 // pred_region
    _
  $region37: #{model_forward.6} parent=0 // pred_fallthru
    _

// kernel: model_forward.9
$region0: #{model_forward.9}
  #allocation0 [shape = 'u32[]', space=smem, size = 0x4, offset = 0x4, fixed_abs, tag = 'smem constant byte address 0x4 - core index']
  #allocation1 [shape = 'u32[144,128]{1,0:T(1,128)}', space=vmem, size = 0x12000, scoped, tag = 'internal scratch']
  %s0 = inlined_call_operand.vmem [shape: f32[120,64], index: 0, kind: input, shape index: {}]
  %s1 = inlined_call_operand.vmem [shape: f32[120,64], index: 1, kind: input, shape index: {}]
  %s2 = inlined_call_operand.vmem [shape: f32[120,2], index: 2, kind: input, shape index: {}]
  %s3 = inlined_call_operand.vmem [shape: f32[1,2], index: 3, kind: output, shape index: {}]
  %s4 = sld [smem:[#allocation0]]
  $region22: #{model_forward.9} parent=0
    _
  %s6 = ssub.s32 1, %s4
  %s7 = scalar_select 0, %s6, %s4
  // Predicated region
  $region2: #{model_forward.9} parent=0 // pred_check
    _
  $region3: #{model_forward.9} parent=0 // pred_check_branch
    %9 = sbr.rel (0) target = $region5
  $region4: #{model_forward.9} parent=0 // pred_region
    _
  $region5: #{model_forward.9} parent=0 // pred_fallthru
    _
  // Predicated region
  $region6: #{model_forward.9} parent=0 // pred_check
    _
  $region7: #{model_forward.9} parent=0 // pred_check_branch
    %11 = sbr.rel (0) target = $region9
  $region8: #{model_forward.9} parent=0 // pred_region
    _
  $region9: #{model_forward.9} parent=0 // pred_fallthru
    _
  // Predicated region
  $region10: #{model_forward.9} parent=0 // pred_check
    _
  $region11: #{model_forward.9} parent=0 // pred_check_branch
    %13 = sbr.rel (0) target = $region13
  $region12: #{model_forward.9} parent=0 // pred_region
    _
  $region13: #{model_forward.9} parent=0 // pred_fallthru
    _
  %v14 = vld [vmem:[%s0] sm:$0xff]
  %v15 = vld [vmem:[%s0 + $0x8] sm:$0xff]
  %v16 = vld [vmem:[%s0 + $0x10] sm:$0xff]
  %v17 = vld [vmem:[%s0 + $0x18] sm:$0xff]
  %v18 = vld [vmem:[%s0 + $0x20] sm:$0xff]
  %v19 = vld [vmem:[%s0 + $0x28] sm:$0xff]
  %v20 = vld [vmem:[%s0 + $0x30] sm:$0xff]
  %v21 = vld [vmem:[%s0 + $0x38] sm:$0xff]
  %v22 = vld [vmem:[%s0 + $0x40] sm:$0xff]
  %v23 = vld [vmem:[%s0 + $0x48] sm:$0xff]
  %v24 = vld [vmem:[%s0 + $0x50] sm:$0xff]
  %v25 = vld [vmem:[%s0 + $0x58] sm:$0xff]
  %v26 = vld [vmem:[%s0 + $0x60] sm:$0xff]
  %v27 = vld [vmem:[%s0 + $0x68] sm:$0xff]
  %v28 = vld [vmem:[%s0 + $0x70] sm:$0xff]
  %v29 = vld [vmem:[%s1] sm:$0xff]
  %v30 = vld [vmem:[%s1 + $0x8] sm:$0xff]
  %v31 = vld [vmem:[%s1 + $0x10] sm:$0xff]
  %v32 = vld [vmem:[%s1 + $0x18] sm:$0xff]
  %v33 = vld [vmem:[%s1 + $0x20] sm:$0xff]
  %v34 = vld [vmem:[%s1 + $0x28] sm:$0xff]
  %v35 = vld [vmem:[%s1 + $0x30] sm:$0xff]
  %v36 = vld [vmem:[%s1 + $0x38] sm:$0xff]
  %v37 = vld [vmem:[%s1 + $0x40] sm:$0xff]
  %v38 = vld [vmem:[%s1 + $0x48] sm:$0xff]
  %v39 = vld [vmem:[%s1 + $0x50] sm:$0xff]
  %v40 = vld [vmem:[%s1 + $0x58] sm:$0xff]
  %v41 = vld [vmem:[%s1 + $0x60] sm:$0xff]
  %v42 = vld [vmem:[%s1 + $0x68] sm:$0xff]
  %v43 = vld [vmem:[%s1 + $0x70] sm:$0xff]
  %v44 = vsub.f32 %v14, %v29
  %v45 = vsub.f32 %v15, %v30
  %v46 = vsub.f32 %v16, %v31
  %v47 = vsub.f32 %v17, %v32
  %v48 = vsub.f32 %v18, %v33
  %v49 = vsub.f32 %v19, %v34
  %v50 = vsub.f32 %v20, %v35
  %v51 = vsub.f32 %v21, %v36
  %v52 = vsub.f32 %v22, %v37
  %v53 = vsub.f32 %v23, %v38
  %v54 = vsub.f32 %v24, %v39
  %v55 = vsub.f32 %v25, %v40
  %v56 = vsub.f32 %v26, %v41
  %v57 = vsub.f32 %v27, %v42
  %v58 = vsub.f32 %v28, %v43
  %v59 = vmul.f32 %v44, %v44
  %v60 = vmul.f32 %v45, %v45
  %v61 = vmul.f32 %v46, %v46
  %v62 = vmul.f32 %v47, %v47
  %v63 = vmul.f32 %v48, %v48
  %v64 = vmul.f32 %v49, %v49
  %v65 = vmul.f32 %v50, %v50
  %v66 = vmul.f32 %v51, %v51
  %v67 = vmul.f32 %v52, %v52
  %v68 = vmul.f32 %v53, %v53
  %v69 = vmul.f32 %v54, %v54
  %v70 = vmul.f32 %v55, %v55
  %v71 = vmul.f32 %v56, %v56
  %v72 = vmul.f32 %v57, %v57
  %v73 = vmul.f32 %v58, %v58
  %vm74 = vcmask 523264
  %v75 = vsel %vm74, %v59, 0.0
  %76 = vadd.xlane.f32.xlu0 %v75
  %v77 = vpop.xlane.xlu0 %76
  %v78 = vsel %vm74, %v60, 0.0
  %79 = vadd.xlane.f32.xlu0 %v78
  %v80 = vpop.xlane.xlu0 %79
  %v81 = vsel %vm74, %v61, 0.0
  %82 = vadd.xlane.f32.xlu0 %v81
  %v83 = vpop.xlane.xlu0 %82
  %v84 = vsel %vm74, %v62, 0.0
  %85 = vadd.xlane.f32.xlu0 %v84
  %v86 = vpop.xlane.xlu0 %85
  %v87 = vsel %vm74, %v63, 0.0
  %88 = vadd.xlane.f32.xlu0 %v87
  %v89 = vpop.xlane.xlu0 %88
  %v90 = vsel %vm74, %v64, 0.0
  %91 = vadd.xlane.f32.xlu0 %v90
  %v92 = vpop.xlane.xlu0 %91
  %v93 = vsel %vm74, %v65, 0.0
  %94 = vadd.xlane.f32.xlu0 %v93
  %v95 = vpop.xlane.xlu0 %94
  %v96 = vsel %vm74, %v66, 0.0
  %97 = vadd.xlane.f32.xlu0 %v96
  %v98 = vpop.xlane.xlu0 %97
  %v99 = vsel %vm74, %v67, 0.0
  %100 = vadd.xlane.f32.xlu0 %v99
  %v101 = vpop.xlane.xlu0 %100
  %v102 = vsel %vm74, %v68, 0.0
  %103 = vadd.xlane.f32.xlu0 %v102
  %v104 = vpop.xlane.xlu0 %103
  %v105 = vsel %vm74, %v69, 0.0
  %106 = vadd.xlane.f32.xlu0 %v105
  %v107 = vpop.xlane.xlu0 %106
  %v108 = vsel %vm74, %v70, 0.0
  %109 = vadd.xlane.f32.xlu0 %v108
  %v110 = vpop.xlane.xlu0 %109
  %v111 = vsel %vm74, %v71, 0.0
  %112 = vadd.xlane.f32.xlu0 %v111
  %v113 = vpop.xlane.xlu0 %112
  %v114 = vsel %vm74, %v72, 0.0
  %115 = vadd.xlane.f32.xlu0 %v114
  %v116 = vpop.xlane.xlu0 %115
  %v117 = vsel %vm74, %v73, 0.0
  %118 = vadd.xlane.f32.xlu0 %v117
  %v119 = vpop.xlane.xlu0 %118
  %v120 = vrcp.pop 64.0
  %v121 = vmul.f32 %v77, %v120
  %v122 = vmul.f32 %v80, %v120
  %v123 = vmul.f32 %v83, %v120
  %v124 = vmul.f32 %v86, %v120
  %v125 = vmul.f32 %v89, %v120
  %v126 = vmul.f32 %v92, %v120
  %v127 = vmul.f32 %v95, %v120
  %v128 = vmul.f32 %v98, %v120
  %v129 = vmul.f32 %v101, %v120
  %v130 = vmul.f32 %v104, %v120
  %v131 = vmul.f32 %v107, %v120
  %v132 = vmul.f32 %v110, %v120
  %v133 = vmul.f32 %v113, %v120
  %v134 = vmul.f32 %v116, %v120
  %v135 = vmul.f32 %v119, %v120
  %v136 = vld [vmem:[%s2] sm:$0xff]
  %v137 = vld [vmem:[%s2 + $0x8] sm:$0xff]
  %v138 = vld [vmem:[%s2 + $0x10] sm:$0xff]
  %v139 = vld [vmem:[%s2 + $0x18] sm:$0xff]
  %v140 = vld [vmem:[%s2 + $0x20] sm:$0xff]
  %v141 = vld [vmem:[%s2 + $0x28] sm:$0xff]
  %v142 = vld [vmem:[%s2 + $0x30] sm:$0xff]
  %v143 = vld [vmem:[%s2 + $0x38] sm:$0xff]
  %v144 = vld [vmem:[%s2 + $0x40] sm:$0xff]
  %v145 = vld [vmem:[%s2 + $0x48] sm:$0xff]
  %v146 = vld [vmem:[%s2 + $0x50] sm:$0xff]
  %v147 = vld [vmem:[%s2 + $0x58] sm:$0xff]
  %v148 = vld [vmem:[%s2 + $0x60] sm:$0xff]
  %v149 = vld [vmem:[%s2 + $0x68] sm:$0xff]
  %v150 = vld [vmem:[%s2 + $0x70] sm:$0xff]
  %v151 = vmul.f32 %v121, %v136
  %v152 = vmul.f32 %v122, %v137
  %v153 = vmul.f32 %v123, %v138
  %v154 = vmul.f32 %v124, %v139
  %v155 = vmul.f32 %v125, %v140
  %v156 = vmul.f32 %v126, %v141
  %v157 = vmul.f32 %v127, %v142
  %v158 = vmul.f32 %v128, %v143
  %v159 = vmul.f32 %v129, %v144
  %v160 = vmul.f32 %v130, %v145
  %v161 = vmul.f32 %v131, %v146
  %v162 = vmul.f32 %v132, %v147
  %v163 = vmul.f32 %v133, %v148
  %v164 = vmul.f32 %v134, %v149
  %v165 = vmul.f32 %v135, %v150
  %vm166 = vcmask 15360
  %v167 = vsel %vm166, %v151, 0.0
  %v168 = vsel %vm166, %v152, 0.0
  %v169 = vadd.f32 %v167, %v168
  %v170 = vsel %vm166, %v153, 0.0
  %v171 = vadd.f32 %v169, %v170
  %v172 = vsel %vm166, %v154, 0.0
  %v173 = vadd.f32 %v171, %v172
  %v174 = vsel %vm166, %v155, 0.0
  %v175 = vadd.f32 %v173, %v174
  %v176 = vsel %vm166, %v156, 0.0
  %v177 = vadd.f32 %v175, %v176
  %v178 = vsel %vm166, %v157, 0.0
  %v179 = vadd.f32 %v177, %v178
  %v180 = vsel %vm166, %v158, 0.0
  %v181 = vadd.f32 %v179, %v180
  %v182 = vsel %vm166, %v159, 0.0
  %v183 = vadd.f32 %v181, %v182
  %v184 = vsel %vm166, %v160, 0.0
  %v185 = vadd.f32 %v183, %v184
  %v186 = vsel %vm166, %v161, 0.0
  %v187 = vadd.f32 %v185, %v186
  %v188 = vsel %vm166, %v162, 0.0
  %v189 = vadd.f32 %v187, %v188
  %v190 = vsel %vm166, %v163, 0.0
  %v191 = vadd.f32 %v189, %v190
  %v192 = vsel %vm166, %v164, 0.0
  %v193 = vadd.f32 %v191, %v192
  %v194 = vsel %vm166, %v165, 0.0
  %v195 = vadd.f32 %v193, %v194
  %v196 = vrot.slane %v195, 4
  %v197 = vadd.f32 %v195, %v196
  %v198 = vrot.slane %v197, 2
  %v199 = vadd.f32 %v197, %v198
  %v200 = vrot.slane %v199, 1
  %v201 = vadd.f32 %v199, %v200
  %vm202 = vcmask 8192
  %203 = vst.msk [vmem:[%s3] sm:$0x1] %vm202, %v201
  // Predicated region
  $region14: #{model_forward.9} parent=0 // pred_check
    _
  $region15: #{model_forward.9} parent=0 // pred_check_branch
    %205 = sbr.rel (0) target = $region17
  $region16: #{model_forward.9} parent=0 // pred_region
    _
  $region17: #{model_forward.9} parent=0 // pred_fallthru
    _
  // Predicated region
  $region18: #{model_forward.9} parent=0 // pred_check
    _
  $region19: #{model_forward.9} parent=0 // pred_check_branch
    %207 = sbr.rel (0) target = $region21
  $region20: #{model_forward.9} parent=0 // pred_region
    _
  $region21: #{model_forward.9} parent=0 // pred_fallthru
    _

// kernel: model_forward.8
$region0: #{model_forward.8}
  #allocation0 [shape = 'u32[]', space=smem, size = 0x4, offset = 0x4, fixed_abs, tag = 'smem constant byte address 0x4 - core index']
  #allocation1 [shape = 'u32[144,128]{1,0:T(1,128)}', space=vmem, size = 0x12000, scoped, tag = 'internal scratch']
  %s0 = inlined_call_operand.vmem [shape: f32[126,128], index: 0, kind: input, shape index: {}]
  %s1 = inlined_call_operand.vmem [shape: f32[126,128], index: 1, kind: input, shape index: {}]
  %s2 = inlined_call_operand.vmem [shape: f32[126,2], index: 2, kind: input, shape index: {}]
  %s3 = inlined_call_operand.vmem [shape: f32[1,2], index: 3, kind: output, shape index: {}]
  %s4 = sld [smem:[#allocation0]]
  $region22: #{model_forward.8} parent=0
    _
  %s6 = ssub.s32 1, %s4
  %s7 = scalar_select 0, %s6, %s4
  // Predicated region
  $region2: #{model_forward.8} parent=0 // pred_check
    _
  $region3: #{model_forward.8} parent=0 // pred_check_branch
    %9 = sbr.rel (0) target = $region5
  $region4: #{model_forward.8} parent=0 // pred_region
    _
  $region5: #{model_forward.8} parent=0 // pred_fallthru
    _
  // Predicated region
  $region6: #{model_forward.8} parent=0 // pred_check
    _
  $region7: #{model_forward.8} parent=0 // pred_check_branch
    %11 = sbr.rel (0) target = $region9
  $region8: #{model_forward.8} parent=0 // pred_region
    _
  $region9: #{model_forward.8} parent=0 // pred_fallthru
    _
  // Predicated region
  $region10: #{model_forward.8} parent=0 // pred_check
    _
  $region11: #{model_forward.8} parent=0 // pred_check_branch
    %13 = sbr.rel (0) target = $region13
  $region12: #{model_forward.8} parent=0 // pred_region
    _
  $region13: #{model_forward.8} parent=0 // pred_fallthru
    _
  %v14 = vld [vmem:[%s0] sm:$0xff]
  %v15 = vld [vmem:[%s0 + $0x8] sm:$0xff]
  %v16 = vld [vmem:[%s0 + $0x10] sm:$0xff]
  %v17 = vld [vmem:[%s0 + $0x18] sm:$0xff]
  %v18 = vld [vmem:[%s0 + $0x20] sm:$0xff]
  %v19 = vld [vmem:[%s0 + $0x28] sm:$0xff]
  %v20 = vld [vmem:[%s0 + $0x30] sm:$0xff]
  %v21 = vld [vmem:[%s0 + $0x38] sm:$0xff]
  %v22 = vld [vmem:[%s0 + $0x40] sm:$0xff]
  %v23 = vld [vmem:[%s0 + $0x48] sm:$0xff]
  %v24 = vld [vmem:[%s0 + $0x50] sm:$0xff]
  %v25 = vld [vmem:[%s0 + $0x58] sm:$0xff]
  %v26 = vld [vmem:[%s0 + $0x60] sm:$0xff]
  %v27 = vld [vmem:[%s0 + $0x68] sm:$0xff]
  %v28 = vld [vmem:[%s0 + $0x70] sm:$0xff]
  %v29 = vld [vmem:[%s0 + $0x78] sm:$0x3f]
  %v30 = vld [vmem:[%s1] sm:$0xff]
  %v31 = vld [vmem:[%s1 + $0x8] sm:$0xff]
  %v32 = vld [vmem:[%s1 + $0x10] sm:$0xff]
  %v33 = vld [vmem:[%s1 + $0x18] sm:$0xff]
  %v34 = vld [vmem:[%s1 + $0x20] sm:$0xff]
  %v35 = vld [vmem:[%s1 + $0x28] sm:$0xff]
  %v36 = vld [vmem:[%s1 + $0x30] sm:$0xff]
  %v37 = vld [vmem:[%s1 + $0x38] sm:$0xff]
  %v38 = vld [vmem:[%s1 + $0x40] sm:$0xff]
  %v39 = vld [vmem:[%s1 + $0x48] sm:$0xff]
  %v40 = vld [vmem:[%s1 + $0x50] sm:$0xff]
  %v41 = vld [vmem:[%s1 + $0x58] sm:$0xff]
  %v42 = vld [vmem:[%s1 + $0x60] sm:$0xff]
  %v43 = vld [vmem:[%s1 + $0x68] sm:$0xff]
  %v44 = vld [vmem:[%s1 + $0x70] sm:$0xff]
  %v45 = vld [vmem:[%s1 + $0x78] sm:$0x3f]
  %vm46 = vcmask 523264
  %v47 = vsel %vm46, %v14, -inf
  %48 = vmax.xlane.f32.xlu0 %v47
  %v49 = vpop.xlane.xlu0 %48
  %v50 = vsel %vm46, %v15, -inf
  %51 = vmax.xlane.f32.xlu0 %v50
  %v52 = vpop.xlane.xlu0 %51
  %v53 = vsel %vm46, %v16, -inf
  %54 = vmax.xlane.f32.xlu0 %v53
  %v55 = vpop.xlane.xlu0 %54
  %v56 = vsel %vm46, %v17, -inf
  %57 = vmax.xlane.f32.xlu0 %v56
  %v58 = vpop.xlane.xlu0 %57
  %v59 = vsel %vm46, %v18, -inf
  %60 = vmax.xlane.f32.xlu0 %v59
  %v61 = vpop.xlane.xlu0 %60
  %v62 = vsel %vm46, %v19, -inf
  %63 = vmax.xlane.f32.xlu0 %v62
  %v64 = vpop.xlane.xlu0 %63
  %v65 = vsel %vm46, %v20, -inf
  %66 = vmax.xlane.f32.xlu0 %v65
  %v67 = vpop.xlane.xlu0 %66
  %v68 = vsel %vm46, %v21, -inf
  %69 = vmax.xlane.f32.xlu0 %v68
  %v70 = vpop.xlane.xlu0 %69
  %v71 = vsel %vm46, %v22, -inf
  %72 = vmax.xlane.f32.xlu0 %v71
  %v73 = vpop.xlane.xlu0 %72
  %v74 = vsel %vm46, %v23, -inf
  %75 = vmax.xlane.f32.xlu0 %v74
  %v76 = vpop.xlane.xlu0 %75
  %v77 = vsel %vm46, %v24, -inf
  %78 = vmax.xlane.f32.xlu0 %v77
  %v79 = vpop.xlane.xlu0 %78
  %v80 = vsel %vm46, %v25, -inf
  %81 = vmax.xlane.f32.xlu0 %v80
  %v82 = vpop.xlane.xlu0 %81
  %v83 = vsel %vm46, %v26, -inf
  %84 = vmax.xlane.f32.xlu0 %v83
  %v85 = vpop.xlane.xlu0 %84
  %v86 = vsel %vm46, %v27, -inf
  %87 = vmax.xlane.f32.xlu0 %v86
  %v88 = vpop.xlane.xlu0 %87
  %v89 = vsel %vm46, %v28, -inf
  %90 = vmax.xlane.f32.xlu0 %v89
  %v91 = vpop.xlane.xlu0 %90
  %vm92 = vcmask 521216
  %v93 = vsel %vm92, %v29, -inf
  %94 = vmax.xlane.f32.xlu0 %v93
  %v95 = vpop.xlane.xlu0 %94
  %v96 = vsub.f32 %v14, %v49
  %v97 = vsub.f32 %v15, %v52
  %v98 = vsub.f32 %v16, %v55
  %v99 = vsub.f32 %v17, %v58
  %v100 = vsub.f32 %v18, %v61
  %v101 = vsub.f32 %v19, %v64
  %v102 = vsub.f32 %v20, %v67
  %v103 = vsub.f32 %v21, %v70
  %v104 = vsub.f32 %v22, %v73
  %v105 = vsub.f32 %v23, %v76
  %v106 = vsub.f32 %v24, %v79
  %v107 = vsub.f32 %v25, %v82
  %v108 = vsub.f32 %v26, %v85
  %v109 = vsub.f32 %v27, %v88
  %v110 = vsub.f32 %v28, %v91
  %v111 = vsub.f32 %v29, %v95
  %v112 = vmul.f32 %v96, 1.442695
  %v113 = vpow.pop %v112
  %v114 = vmul.f32 %v97, 1.442695
  %v115 = vpow.pop %v114
  %v116 = vmul.f32 %v98, 1.442695
  %v117 = vpow.pop %v116
  %v118 = vmul.f32 %v99, 1.442695
  %v119 = vpow.pop %v118
  %v120 = vmul.f32 %v100, 1.442695
  %v121 = vpow.pop %v120
  %v122 = vmul.f32 %v101, 1.442695
  %v123 = vpow.pop %v122
  %v124 = vmul.f32 %v102, 1.442695
  %v125 = vpow.pop %v124
  %v126 = vmul.f32 %v103, 1.442695
  %v127 = vpow.pop %v126
  %v128 = vmul.f32 %v104, 1.442695
  %v129 = vpow.pop %v128
  %v130 = vmul.f32 %v105, 1.442695
  %v131 = vpow.pop %v130
  %v132 = vmul.f32 %v106, 1.442695
  %v133 = vpow.pop %v132
  %v134 = vmul.f32 %v107, 1.442695
  %v135 = vpow.pop %v134
  %v136 = vmul.f32 %v108, 1.442695
  %v137 = vpow.pop %v136
  %v138 = vmul.f32 %v109, 1.442695
  %v139 = vpow.pop %v138
  %v140 = vmul.f32 %v110, 1.442695
  %v141 = vpow.pop %v140
  %v142 = vmul.f32 %v111, 1.442695
  %v143 = vpow.pop %v142
  %v144 = vsel %vm46, %v113, 0.0
  %145 = vadd.xlane.f32.xlu0 %v144
  %v146 = vpop.xlane.xlu0 %145
  %v147 = vsel %vm46, %v115, 0.0
  %148 = vadd.xlane.f32.xlu0 %v147
  %v149 = vpop.xlane.xlu0 %148
  %v150 = vsel %vm46, %v117, 0.0
  %151 = vadd.xlane.f32.xlu0 %v150
  %v152 = vpop.xlane.xlu0 %151
  %v153 = vsel %vm46, %v119, 0.0
  %154 = vadd.xlane.f32.xlu0 %v153
  %v155 = vpop.xlane.xlu0 %154
  %v156 = vsel %vm46, %v121, 0.0
  %157 = vadd.xlane.f32.xlu0 %v156
  %v158 = vpop.xlane.xlu0 %157
  %v159 = vsel %vm46, %v123, 0.0
  %160 = vadd.xlane.f32.xlu0 %v159
  %v161 = vpop.xlane.xlu0 %160
  %v162 = vsel %vm46, %v125, 0.0
  %163 = vadd.xlane.f32.xlu0 %v162
  %v164 = vpop.xlane.xlu0 %163
  %v165 = vsel %vm46, %v127, 0.0
  %166 = vadd.xlane.f32.xlu0 %v165
  %v167 = vpop.xlane.xlu0 %166
  %v168 = vsel %vm46, %v129, 0.0
  %169 = vadd.xlane.f32.xlu0 %v168
  %v170 = vpop.xlane.xlu0 %169
  %v171 = vsel %vm46, %v131, 0.0
  %172 = vadd.xlane.f32.xlu0 %v171
  %v173 = vpop.xlane.xlu0 %172
  %v174 = vsel %vm46, %v133, 0.0
  %175 = vadd.xlane.f32.xlu0 %v174
  %v176 = vpop.xlane.xlu0 %175
  %v177 = vsel %vm46, %v135, 0.0
  %178 = vadd.xlane.f32.xlu0 %v177
  %v179 = vpop.xlane.xlu0 %178
  %v180 = vsel %vm46, %v137, 0.0
  %181 = vadd.xlane.f32.xlu0 %v180
  %v182 = vpop.xlane.xlu0 %181
  %v183 = vsel %vm46, %v139, 0.0
  %184 = vadd.xlane.f32.xlu0 %v183
  %v185 = vpop.xlane.xlu0 %184
  %v186 = vsel %vm46, %v141, 0.0
  %187 = vadd.xlane.f32.xlu0 %v186
  %v188 = vpop.xlane.xlu0 %187
  %v189 = vsel %vm92, %v143, 0.0
  %190 = vadd.xlane.f32.xlu0 %v189
  %v191 = vpop.xlane.xlu0 %190
  %v192 = vlog2.pop %v146
  %v193 = vmul.f32 %v192, 0.6931472
  %v194 = vlog2.pop %v149
  %v195 = vmul.f32 %v194, 0.6931472
  %v196 = vlog2.pop %v152
  %v197 = vmul.f32 %v196, 0.6931472
  %v198 = vlog2.pop %v155
  %v199 = vmul.f32 %v198, 0.6931472
  %v200 = vlog2.pop %v158
  %v201 = vmul.f32 %v200, 0.6931472
  %v202 = vlog2.pop %v161
  %v203 = vmul.f32 %v202, 0.6931472
  %v204 = vlog2.pop %v164
  %v205 = vmul.f32 %v204, 0.6931472
  %v206 = vlog2.pop %v167
  %v207 = vmul.f32 %v206, 0.6931472
  %v208 = vlog2.pop %v170
  %v209 = vmul.f32 %v208, 0.6931472
  %v210 = vlog2.pop %v173
  %v211 = vmul.f32 %v210, 0.6931472
  %v212 = vlog2.pop %v176
  %v213 = vmul.f32 %v212, 0.6931472
  %v214 = vlog2.pop %v179
  %v215 = vmul.f32 %v214, 0.6931472
  %v216 = vlog2.pop %v182
  %v217 = vmul.f32 %v216, 0.6931472
  %v218 = vlog2.pop %v185
  %v219 = vmul.f32 %v218, 0.6931472
  %v220 = vlog2.pop %v188
  %v221 = vmul.f32 %v220, 0.6931472
  %v222 = vlog2.pop %v191
  %v223 = vmul.f32 %v222, 0.6931472
  %v224 = vadd.f32 %v193, %v49
  %v225 = vadd.f32 %v195, %v52
  %v226 = vadd.f32 %v197, %v55
  %v227 = vadd.f32 %v199, %v58
  %v228 = vadd.f32 %v201, %v61
  %v229 = vadd.f32 %v203, %v64
  %v230 = vadd.f32 %v205, %v67
  %v231 = vadd.f32 %v207, %v70
  %v232 = vadd.f32 %v209, %v73
  %v233 = vadd.f32 %v211, %v76
  %v234 = vadd.f32 %v213, %v79
  %v235 = vadd.f32 %v215, %v82
  %v236 = vadd.f32 %v217, %v85
  %v237 = vadd.f32 %v219, %v88
  %v238 = vadd.f32 %v221, %v91
  %v239 = vadd.f32 %v223, %v95
  %v240 = vmax.f32 %v30, 1e-12
  %v241 = vmax.f32 %v31, 1e-12
  %v242 = vmax.f32 %v32, 1e-12
  %v243 = vmax.f32 %v33, 1e-12
  %v244 = vmax.f32 %v34, 1e-12
  %v245 = vmax.f32 %v35, 1e-12
  %v246 = vmax.f32 %v36, 1e-12
  %v247 = vmax.f32 %v37, 1e-12
  %v248 = vmax.f32 %v38, 1e-12
  %v249 = vmax.f32 %v39, 1e-12
  %v250 = vmax.f32 %v40, 1e-12
  %v251 = vmax.f32 %v41, 1e-12
  %v252 = vmax.f32 %v42, 1e-12
  %v253 = vmax.f32 %v43, 1e-12
  %v254 = vmax.f32 %v44, 1e-12
  %v255 = vmax.f32 %v45, 1e-12
  %v256 = vlog2.pop %v240
  %v257 = vmul.f32 %v256, 0.6931472
  %v258 = vlog2.pop %v241
  %v259 = vmul.f32 %v258, 0.6931472
  %v260 = vlog2.pop %v242
  %v261 = vmul.f32 %v260, 0.6931472
  %v262 = vlog2.pop %v243
  %v263 = vmul.f32 %v262, 0.6931472
  %v264 = vlog2.pop %v244
  %v265 = vmul.f32 %v264, 0.6931472
  %v266 = vlog2.pop %v245
  %v267 = vmul.f32 %v266, 0.6931472
  %v268 = vlog2.pop %v246
  %v269 = vmul.f32 %v268, 0.6931472
  %v270 = vlog2.pop %v247
  %v271 = vmul.f32 %v270, 0.6931472
  %v272 = vlog2.pop %v248
  %v273 = vmul.f32 %v272, 0.6931472
  %v274 = vlog2.pop %v249
  %v275 = vmul.f32 %v274, 0.6931472
  %v276 = vlog2.pop %v250
  %v277 = vmul.f32 %v276, 0.6931472
  %v278 = vlog2.pop %v251
  %v279 = vmul.f32 %v278, 0.6931472
  %v280 = vlog2.pop %v252
  %v281 = vmul.f32 %v280, 0.6931472
  %v282 = vlog2.pop %v253
  %v283 = vmul.f32 %v282, 0.6931472
  %v284 = vlog2.pop %v254
  %v285 = vmul.f32 %v284, 0.6931472
  %v286 = vlog2.pop %v255
  %v287 = vmul.f32 %v286, 0.6931472
  %v288 = vsub.f32 %v14, %v224
  %v289 = vsub.f32 %v15, %v225
  %v290 = vsub.f32 %v16, %v226
  %v291 = vsub.f32 %v17, %v227
  %v292 = vsub.f32 %v18, %v228
  %v293 = vsub.f32 %v19, %v229
  %v294 = vsub.f32 %v20, %v230
  %v295 = vsub.f32 %v21, %v231
  %v296 = vsub.f32 %v22, %v232
  %v297 = vsub.f32 %v23, %v233
  %v298 = vsub.f32 %v24, %v234
  %v299 = vsub.f32 %v25, %v235
  %v300 = vsub.f32 %v26, %v236
  %v301 = vsub.f32 %v27, %v237
  %v302 = vsub.f32 %v28, %v238
  %v303 = vsub.f32 %v29, %v239
  %v304 = vsub.f32 %v257, %v288
  %v305 = vsub.f32 %v259, %v289
  %v306 = vsub.f32 %v261, %v290
  %v307 = vsub.f32 %v263, %v291
  %v308 = vsub.f32 %v265, %v292
  %v309 = vsub.f32 %v267, %v293
  %v310 = vsub.f32 %v269, %v294
  %v311 = vsub.f32 %v271, %v295
  %v312 = vsub.f32 %v273, %v296
  %v313 = vsub.f32 %v275, %v297
  %v314 = vsub.f32 %v277, %v298
  %v315 = vsub.f32 %v279, %v299
  %v316 = vsub.f32 %v281, %v300
  %v317 = vsub.f32 %v283, %v301
  %v318 = vsub.f32 %v285, %v302
  %v319 = vsub.f32 %v287, %v303
  %v320 = vmul.f32 %v30, %v304
  %v321 = vmul.f32 %v31, %v305
  %v322 = vmul.f32 %v32, %v306
  %v323 = vmul.f32 %v33, %v307
  %v324 = vmul.f32 %v34, %v308
  %v325 = vmul.f32 %v35, %v309
  %v326 = vmul.f32 %v36, %v310
  %v327 = vmul.f32 %v37, %v311
  %v328 = vmul.f32 %v38, %v312
  %v329 = vmul.f32 %v39, %v313
  %v330 = vmul.f32 %v40, %v314
  %v331 = vmul.f32 %v41, %v315
  %v332 = vmul.f32 %v42, %v316
  %v333 = vmul.f32 %v43, %v317
  %v334 = vmul.f32 %v44, %v318
  %v335 = vmul.f32 %v45, %v319
  %v336 = vsel %vm46, %v320, 0.0
  %337 = vadd.xlane.f32.xlu0 %v336
  %v338 = vpop.xlane.xlu0 %337
  %v339 = vsel %vm46, %v321, 0.0
  %340 = vadd.xlane.f32.xlu0 %v339
  %v341 = vpop.xlane.xlu0 %340
  %v342 = vsel %vm46, %v322, 0.0
  %343 = vadd.xlane.f32.xlu0 %v342
  %v344 = vpop.xlane.xlu0 %343
  %v345 = vsel %vm46, %v323, 0.0
  %346 = vadd.xlane.f32.xlu0 %v345
  %v347 = vpop.xlane.xlu0 %346
  %v348 = vsel %vm46, %v324, 0.0
  %349 = vadd.xlane.f32.xlu0 %v348
  %v350 = vpop.xlane.xlu0 %349
  %v351 = vsel %vm46, %v325, 0.0
  %352 = vadd.xlane.f32.xlu0 %v351
  %v353 = vpop.xlane.xlu0 %352
  %v354 = vsel %vm46, %v326, 0.0
  %355 = vadd.xlane.f32.xlu0 %v354
  %v356 = vpop.xlane.xlu0 %355
  %v357 = vsel %vm46, %v327, 0.0
  %358 = vadd.xlane.f32.xlu0 %v357
  %v359 = vpop.xlane.xlu0 %358
  %v360 = vsel %vm46, %v328, 0.0
  %361 = vadd.xlane.f32.xlu0 %v360
  %v362 = vpop.xlane.xlu0 %361
  %v363 = vsel %vm46, %v329, 0.0
  %364 = vadd.xlane.f32.xlu0 %v363
  %v365 = vpop.xlane.xlu0 %364
  %v366 = vsel %vm46, %v330, 0.0
  %367 = vadd.xlane.f32.xlu0 %v366
  %v368 = vpop.xlane.xlu0 %367
  %v369 = vsel %vm46, %v331, 0.0
  %370 = vadd.xlane.f32.xlu0 %v369
  %v371 = vpop.xlane.xlu0 %370
  %v372 = vsel %vm46, %v332, 0.0
  %373 = vadd.xlane.f32.xlu0 %v372
  %v374 = vpop.xlane.xlu0 %373
  %v375 = vsel %vm46, %v333, 0.0
  %376 = vadd.xlane.f32.xlu0 %v375
  %v377 = vpop.xlane.xlu0 %376
  %v378 = vsel %vm46, %v334, 0.0
  %379 = vadd.xlane.f32.xlu0 %v378
  %v380 = vpop.xlane.xlu0 %379
  %v381 = vsel %vm92, %v335, 0.0
  %382 = vadd.xlane.f32.xlu0 %v381
  %v383 = vpop.xlane.xlu0 %382
  %v384 = vrcp.pop 64.0
  %v385 = vmul.f32 %v338, %v384
  %v386 = vmul.f32 %v341, %v384
  %v387 = vmul.f32 %v344, %v384
  %v388 = vmul.f32 %v347, %v384
  %v389 = vmul.f32 %v350, %v384
  %v390 = vmul.f32 %v353, %v384
  %v391 = vmul.f32 %v356, %v384
  %v392 = vmul.f32 %v359, %v384
  %v393 = vmul.f32 %v362, %v384
  %v394 = vmul.f32 %v365, %v384
  %v395 = vmul.f32 %v368, %v384
  %v396 = vmul.f32 %v371, %v384
  %v397 = vmul.f32 %v374, %v384
  %v398 = vmul.f32 %v377, %v384
  %v399 = vmul.f32 %v380, %v384
  %v400 = vmul.f32 %v383, %v384
  %vm401 = vcmask 1048064
  %v402 = vsel %vm401, %v14, -inf
  %403 = vmax.xlane.f32.xlu0 %v402
  %v404 = vpop.xlane.xlu0 %403
  %v405 = vsel %vm401, %v15, -inf
  %406 = vmax.xlane.f32.xlu0 %v405
  %v407 = vpop.xlane.xlu0 %406
  %v408 = vsel %vm401, %v16, -inf
  %409 = vmax.xlane.f32.xlu0 %v408
  %v410 = vpop.xlane.xlu0 %409
  %v411 = vsel %vm401, %v17, -inf
  %412 = vmax.xlane.f32.xlu0 %v411
  %v413 = vpop.xlane.xlu0 %412
  %v414 = vsel %vm401, %v18, -inf
  %415 = vmax.xlane.f32.xlu0 %v414
  %v416 = vpop.xlane.xlu0 %415
  %v417 = vsel %vm401, %v19, -inf
  %418 = vmax.xlane.f32.xlu0 %v417
  %v419 = vpop.xlane.xlu0 %418
  %v420 = vsel %vm401, %v20, -inf
  %421 = vmax.xlane.f32.xlu0 %v420
  %v422 = vpop.xlane.xlu0 %421
  %v423 = vsel %vm401, %v21, -inf
  %424 = vmax.xlane.f32.xlu0 %v423
  %v425 = vpop.xlane.xlu0 %424
  %v426 = vsel %vm401, %v22, -inf
  %427 = vmax.xlane.f32.xlu0 %v426
  %v428 = vpop.xlane.xlu0 %427
  %v429 = vsel %vm401, %v23, -inf
  %430 = vmax.xlane.f32.xlu0 %v429
  %v431 = vpop.xlane.xlu0 %430
  %v432 = vsel %vm401, %v24, -inf
  %433 = vmax.xlane.f32.xlu0 %v432
  %v434 = vpop.xlane.xlu0 %433
  %v435 = vsel %vm401, %v25, -inf
  %436 = vmax.xlane.f32.xlu0 %v435
  %v437 = vpop.xlane.xlu0 %436
  %v438 = vsel %vm401, %v26, -inf
  %439 = vmax.xlane.f32.xlu0 %v438
  %v440 = vpop.xlane.xlu0 %439
  %v441 = vsel %vm401, %v27, -inf
  %442 = vmax.xlane.f32.xlu0 %v441
  %v443 = vpop.xlane.xlu0 %442
  %v444 = vsel %vm401, %v28, -inf
  %445 = vmax.xlane.f32.xlu0 %v444
  %v446 = vpop.xlane.xlu0 %445
  %vm447 = vcmask 1046016
  %v448 = vsel %vm447, %v29, -inf
  %449 = vmax.xlane.f32.xlu0 %v448
  %v450 = vpop.xlane.xlu0 %449
  %v451 = vsub.f32 %v14, %v404
  %v452 = vsub.f32 %v15, %v407
  %v453 = vsub.f32 %v16, %v410
  %v454 = vsub.f32 %v17, %v413
  %v455 = vsub.f32 %v18, %v416
  %v456 = vsub.f32 %v19, %v419
  %v457 = vsub.f32 %v20, %v422
  %v458 = vsub.f32 %v21, %v425
  %v459 = vsub.f32 %v22, %v428
  %v460 = vsub.f32 %v23, %v431
  %v461 = vsub.f32 %v24, %v434
  %v462 = vsub.f32 %v25, %v437
  %v463 = vsub.f32 %v26, %v440
  %v464 = vsub.f32 %v27, %v443
  %v465 = vsub.f32 %v28, %v446
  %v466 = vsub.f32 %v29, %v450
  %v467 = vmul.f32 %v451, 1.442695
  %v468 = vpow.pop %v467
  %v469 = vmul.f32 %v452, 1.442695
  %v470 = vpow.pop %v469
  %v471 = vmul.f32 %v453, 1.442695
  %v472 = vpow.pop %v471
  %v473 = vmul.f32 %v454, 1.442695
  %v474 = vpow.pop %v473
  %v475 = vmul.f32 %v455, 1.442695
  %v476 = vpow.pop %v475
  %v477 = vmul.f32 %v456, 1.442695
  %v478 = vpow.pop %v477
  %v479 = vmul.f32 %v457, 1.442695
  %v480 = vpow.pop %v479
  %v481 = vmul.f32 %v458, 1.442695
  %v482 = vpow.pop %v481
  %v483 = vmul.f32 %v459, 1.442695
  %v484 = vpow.pop %v483
  %v485 = vmul.f32 %v460, 1.442695
  %v486 = vpow.pop %v485
  %v487 = vmul.f32 %v461, 1.442695
  %v488 = vpow.pop %v487
  %v489 = vmul.f32 %v462, 1.442695
  %v490 = vpow.pop %v489
  %v491 = vmul.f32 %v463, 1.442695
  %v492 = vpow.pop %v491
  %v493 = vmul.f32 %v464, 1.442695
  %v494 = vpow.pop %v493
  %v495 = vmul.f32 %v465, 1.442695
  %v496 = vpow.pop %v495
  %v497 = vmul.f32 %v466, 1.442695
  %v498 = vpow.pop %v497
  %515 = vrot.lane.b32.xlu0 %v468, 64
  %v516 = vpop.permute.xlu0 %515
  %517 = vrot.lane.b32.xlu0 %v470, 64
  %v518 = vpop.permute.xlu0 %517
  %519 = vrot.lane.b32.xlu0 %v472, 64
  %v520 = vpop.permute.xlu0 %519
  %521 = vrot.lane.b32.xlu0 %v474, 64
  %v522 = vpop.permute.xlu0 %521
  %523 = vrot.lane.b32.xlu0 %v476, 64
  %v524 = vpop.permute.xlu0 %523
  %525 = vrot.lane.b32.xlu0 %v478, 64
  %v526 = vpop.permute.xlu0 %525
  %527 = vrot.lane.b32.xlu0 %v480, 64
  %v528 = vpop.permute.xlu0 %527
  %529 = vrot.lane.b32.xlu0 %v482, 64
  %v530 = vpop.permute.xlu0 %529
  %531 = vrot.lane.b32.xlu0 %v484, 64
  %v532 = vpop.permute.xlu0 %531
  %533 = vrot.lane.b32.xlu0 %v486, 64
  %v534 = vpop.permute.xlu0 %533
  %535 = vrot.lane.b32.xlu0 %v488, 64
  %v536 = vpop.permute.xlu0 %535
  %537 = vrot.lane.b32.xlu0 %v490, 64
  %v538 = vpop.permute.xlu0 %537
  %539 = vrot.lane.b32.xlu0 %v492, 64
  %v540 = vpop.permute.xlu0 %539
  %541 = vrot.lane.b32.xlu0 %v494, 64
  %v542 = vpop.permute.xlu0 %541
  %543 = vrot.lane.b32.xlu0 %v496, 64
  %v544 = vpop.permute.xlu0 %543
  %545 = vrot.lane.b32.xlu0 %v498, 64
  %v546 = vpop.permute.xlu0 %545
  %v563 = vsel %vm46, %v516, 0.0
  %564 = vadd.xlane.f32.xlu0 %v563
  %v565 = vpop.xlane.xlu0 %564
  %v566 = vsel %vm46, %v518, 0.0
  %567 = vadd.xlane.f32.xlu0 %v566
  %v568 = vpop.xlane.xlu0 %567
  %v569 = vsel %vm46, %v520, 0.0
  %570 = vadd.xlane.f32.xlu0 %v569
  %v571 = vpop.xlane.xlu0 %570
  %v572 = vsel %vm46, %v522, 0.0
  %573 = vadd.xlane.f32.xlu0 %v572
  %v574 = vpop.xlane.xlu0 %573
  %v575 = vsel %vm46, %v524, 0.0
  %576 = vadd.xlane.f32.xlu0 %v575
  %v577 = vpop.xlane.xlu0 %576
  %v578 = vsel %vm46, %v526, 0.0
  %579 = vadd.xlane.f32.xlu0 %v578
  %v580 = vpop.xlane.xlu0 %579
  %v581 = vsel %vm46, %v528, 0.0
  %582 = vadd.xlane.f32.xlu0 %v581
  %v583 = vpop.xlane.xlu0 %582
  %v584 = vsel %vm46, %v530, 0.0
  %585 = vadd.xlane.f32.xlu0 %v584
  %v586 = vpop.xlane.xlu0 %585
  %v587 = vsel %vm46, %v532, 0.0
  %588 = vadd.xlane.f32.xlu0 %v587
  %v589 = vpop.xlane.xlu0 %588
  %v590 = vsel %vm46, %v534, 0.0
  %591 = vadd.xlane.f32.xlu0 %v590
  %v592 = vpop.xlane.xlu0 %591
  %v593 = vsel %vm46, %v536, 0.0
  %594 = vadd.xlane.f32.xlu0 %v593
  %v595 = vpop.xlane.xlu0 %594
  %v596 = vsel %vm46, %v538, 0.0
  %597 = vadd.xlane.f32.xlu0 %v596
  %v598 = vpop.xlane.xlu0 %597
  %v599 = vsel %vm46, %v540, 0.0
  %600 = vadd.xlane.f32.xlu0 %v599
  %v601 = vpop.xlane.xlu0 %600
  %v602 = vsel %vm46, %v542, 0.0
  %603 = vadd.xlane.f32.xlu0 %v602
  %v604 = vpop.xlane.xlu0 %603
  %v605 = vsel %vm46, %v544, 0.0
  %606 = vadd.xlane.f32.xlu0 %v605
  %v607 = vpop.xlane.xlu0 %606
  %v608 = vsel %vm92, %v546, 0.0
  %609 = vadd.xlane.f32.xlu0 %v608
  %v610 = vpop.xlane.xlu0 %609
  %v611 = vlog2.pop %v565
  %v612 = vmul.f32 %v611, 0.6931472
  %v613 = vlog2.pop %v568
  %v614 = vmul.f32 %v613, 0.6931472
  %v615 = vlog2.pop %v571
  %v616 = vmul.f32 %v615, 0.6931472
  %v617 = vlog2.pop %v574
  %v618 = vmul.f32 %v617, 0.6931472
  %v619 = vlog2.pop %v577
  %v620 = vmul.f32 %v619, 0.6931472
  %v621 = vlog2.pop %v580
  %v622 = vmul.f32 %v621, 0.6931472
  %v623 = vlog2.pop %v583
  %v624 = vmul.f32 %v623, 0.6931472
  %v625 = vlog2.pop %v586
  %v626 = vmul.f32 %v625, 0.6931472
  %v627 = vlog2.pop %v589
  %v628 = vmul.f32 %v627, 0.6931472
  %v629 = vlog2.pop %v592
  %v630 = vmul.f32 %v629, 0.6931472
  %v631 = vlog2.pop %v595
  %v632 = vmul.f32 %v631, 0.6931472
  %v633 = vlog2.pop %v598
  %v634 = vmul.f32 %v633, 0.6931472
  %v635 = vlog2.pop %v601
  %v636 = vmul.f32 %v635, 0.6931472
  %v637 = vlog2.pop %v604
  %v638 = vmul.f32 %v637, 0.6931472
  %v639 = vlog2.pop %v607
  %v640 = vmul.f32 %v639, 0.6931472
  %v641 = vlog2.pop %v610
  %v642 = vmul.f32 %v641, 0.6931472
  %v643 = vadd.f32 %v612, %v404
  %v644 = vadd.f32 %v614, %v407
  %v645 = vadd.f32 %v616, %v410
  %v646 = vadd.f32 %v618, %v413
  %v647 = vadd.f32 %v620, %v416
  %v648 = vadd.f32 %v622, %v419
  %v649 = vadd.f32 %v624, %v422
  %v650 = vadd.f32 %v626, %v425
  %v651 = vadd.f32 %v628, %v428
  %v652 = vadd.f32 %v630, %v431
  %v653 = vadd.f32 %v632, %v434
  %v654 = vadd.f32 %v634, %v437
  %v655 = vadd.f32 %v636, %v440
  %v656 = vadd.f32 %v638, %v443
  %v657 = vadd.f32 %v640, %v446
  %v658 = vadd.f32 %v642, %v450
  %v659 = vsub.f32 %v14, %v643
  %v660 = vsub.f32 %v15, %v644
  %v661 = vsub.f32 %v16, %v645
  %v662 = vsub.f32 %v17, %v646
  %v663 = vsub.f32 %v18, %v647
  %v664 = vsub.f32 %v19, %v648
  %v665 = vsub.f32 %v20, %v649
  %v666 = vsub.f32 %v21, %v650
  %v667 = vsub.f32 %v22, %v651
  %v668 = vsub.f32 %v23, %v652
  %v669 = vsub.f32 %v24, %v653
  %v670 = vsub.f32 %v25, %v654
  %v671 = vsub.f32 %v26, %v655
  %v672 = vsub.f32 %v27, %v656
  %v673 = vsub.f32 %v28, %v657
  %v674 = vsub.f32 %v29, %v658
  %v675 = vsub.f32 %v257, %v659
  %v676 = vsub.f32 %v259, %v660
  %v677 = vsub.f32 %v261, %v661
  %v678 = vsub.f32 %v263, %v662
  %v679 = vsub.f32 %v265, %v663
  %v680 = vsub.f32 %v267, %v664
  %v681 = vsub.f32 %v269, %v665
  %v682 = vsub.f32 %v271, %v666
  %v683 = vsub.f32 %v273, %v667
  %v684 = vsub.f32 %v275, %v668
  %v685 = vsub.f32 %v277, %v669
  %v686 = vsub.f32 %v279, %v670
  %v687 = vsub.f32 %v281, %v671
  %v688 = vsub.f32 %v283, %v672
  %v689 = vsub.f32 %v285, %v673
  %v690 = vsub.f32 %v287, %v674
  %v691 = vmul.f32 %v30, %v675
  %v692 = vmul.f32 %v31, %v676
  %v693 = vmul.f32 %v32, %v677
  %v694 = vmul.f32 %v33, %v678
  %v695 = vmul.f32 %v34, %v679
  %v696 = vmul.f32 %v35, %v680
  %v697 = vmul.f32 %v36, %v681
  %v698 = vmul.f32 %v37, %v682
  %v699 = vmul.f32 %v38, %v683
  %v700 = vmul.f32 %v39, %v684
  %v701 = vmul.f32 %v40, %v685
  %v702 = vmul.f32 %v41, %v686
  %v703 = vmul.f32 %v42, %v687
  %v704 = vmul.f32 %v43, %v688
  %v705 = vmul.f32 %v44, %v689
  %v706 = vmul.f32 %v45, %v690
  %723 = vrot.lane.b32.xlu0 %v691, 64
  %v724 = vpop.permute.xlu0 %723
  %725 = vrot.lane.b32.xlu0 %v692, 64
  %v726 = vpop.permute.xlu0 %725
  %727 = vrot.lane.b32.xlu0 %v693, 64
  %v728 = vpop.permute.xlu0 %727
  %729 = vrot.lane.b32.xlu0 %v694, 64
  %v730 = vpop.permute.xlu0 %729
  %731 = vrot.lane.b32.xlu0 %v695, 64
  %v732 = vpop.permute.xlu0 %731
  %733 = vrot.lane.b32.xlu0 %v696, 64
  %v734 = vpop.permute.xlu0 %733
  %735 = vrot.lane.b32.xlu0 %v697, 64
  %v736 = vpop.permute.xlu0 %735
  %737 = vrot.lane.b32.xlu0 %v698, 64
  %v738 = vpop.permute.xlu0 %737
  %739 = vrot.lane.b32.xlu0 %v699, 64
  %v740 = vpop.permute.xlu0 %739
  %741 = vrot.lane.b32.xlu0 %v700, 64
  %v742 = vpop.permute.xlu0 %741
  %743 = vrot.lane.b32.xlu0 %v701, 64
  %v744 = vpop.permute.xlu0 %743
  %745 = vrot.lane.b32.xlu0 %v702, 64
  %v746 = vpop.permute.xlu0 %745
  %747 = vrot.lane.b32.xlu0 %v703, 64
  %v748 = vpop.permute.xlu0 %747
  %749 = vrot.lane.b32.xlu0 %v704, 64
  %v750 = vpop.permute.xlu0 %749
  %751 = vrot.lane.b32.xlu0 %v705, 64
  %v752 = vpop.permute.xlu0 %751
  %753 = vrot.lane.b32.xlu0 %v706, 64
  %v754 = vpop.permute.xlu0 %753
  %v771 = vsel %vm46, %v724, 0.0
  %772 = vadd.xlane.f32.xlu0 %v771
  %v773 = vpop.xlane.xlu0 %772
  %v774 = vsel %vm46, %v726, 0.0
  %775 = vadd.xlane.f32.xlu0 %v774
  %v776 = vpop.xlane.xlu0 %775
  %v777 = vsel %vm46, %v728, 0.0
  %778 = vadd.xlane.f32.xlu0 %v777
  %v779 = vpop.xlane.xlu0 %778
  %v780 = vsel %vm46, %v730, 0.0
  %781 = vadd.xlane.f32.xlu0 %v780
  %v782 = vpop.xlane.xlu0 %781
  %v783 = vsel %vm46, %v732, 0.0
  %784 = vadd.xlane.f32.xlu0 %v783
  %v785 = vpop.xlane.xlu0 %784
  %v786 = vsel %vm46, %v734, 0.0
  %787 = vadd.xlane.f32.xlu0 %v786
  %v788 = vpop.xlane.xlu0 %787
  %v789 = vsel %vm46, %v736, 0.0
  %790 = vadd.xlane.f32.xlu0 %v789
  %v791 = vpop.xlane.xlu0 %790
  %v792 = vsel %vm46, %v738, 0.0
  %793 = vadd.xlane.f32.xlu0 %v792
  %v794 = vpop.xlane.xlu0 %793
  %v795 = vsel %vm46, %v740, 0.0
  %796 = vadd.xlane.f32.xlu0 %v795
  %v797 = vpop.xlane.xlu0 %796
  %v798 = vsel %vm46, %v742, 0.0
  %799 = vadd.xlane.f32.xlu0 %v798
  %v800 = vpop.xlane.xlu0 %799
  %v801 = vsel %vm46, %v744, 0.0
  %802 = vadd.xlane.f32.xlu0 %v801
  %v803 = vpop.xlane.xlu0 %802
  %v804 = vsel %vm46, %v746, 0.0
  %805 = vadd.xlane.f32.xlu0 %v804
  %v806 = vpop.xlane.xlu0 %805
  %v807 = vsel %vm46, %v748, 0.0
  %808 = vadd.xlane.f32.xlu0 %v807
  %v809 = vpop.xlane.xlu0 %808
  %v810 = vsel %vm46, %v750, 0.0
  %811 = vadd.xlane.f32.xlu0 %v810
  %v812 = vpop.xlane.xlu0 %811
  %v813 = vsel %vm46, %v752, 0.0
  %814 = vadd.xlane.f32.xlu0 %v813
  %v815 = vpop.xlane.xlu0 %814
  %v816 = vsel %vm92, %v754, 0.0
  %817 = vadd.xlane.f32.xlu0 %v816
  %v818 = vpop.xlane.xlu0 %817
  %v819 = vmul.f32 %v773, %v384
  %v820 = vmul.f32 %v776, %v384
  %v821 = vmul.f32 %v779, %v384
  %v822 = vmul.f32 %v782, %v384
  %v823 = vmul.f32 %v785, %v384
  %v824 = vmul.f32 %v788, %v384
  %v825 = vmul.f32 %v791, %v384
  %v826 = vmul.f32 %v794, %v384
  %v827 = vmul.f32 %v797, %v384
  %v828 = vmul.f32 %v800, %v384
  %v829 = vmul.f32 %v803, %v384
  %v830 = vmul.f32 %v806, %v384
  %v831 = vmul.f32 %v809, %v384
  %v832 = vmul.f32 %v812, %v384
  %v833 = vmul.f32 %v815, %v384
  %v834 = vmul.f32 %v818, %v384
  %v835 = vadd.f32 %v385, %v819
  %v836 = vadd.f32 %v386, %v820
  %v837 = vadd.f32 %v387, %v821
  %v838 = vadd.f32 %v388, %v822
  %v839 = vadd.f32 %v389, %v823
  %v840 = vadd.f32 %v390, %v824
  %v841 = vadd.f32 %v391, %v825
  %v842 = vadd.f32 %v392, %v826
  %v843 = vadd.f32 %v393, %v827
  %v844 = vadd.f32 %v394, %v828
  %v845 = vadd.f32 %v395, %v829
  %v846 = vadd.f32 %v396, %v830
  %v847 = vadd.f32 %v397, %v831
  %v848 = vadd.f32 %v398, %v832
  %v849 = vadd.f32 %v399, %v833
  %v850 = vadd.f32 %v400, %v834
  %v851 = vld [vmem:[%s2] sm:$0xff]
  %v852 = vld [vmem:[%s2 + $0x8] sm:$0xff]
  %v853 = vld [vmem:[%s2 + $0x10] sm:$0xff]
  %v854 = vld [vmem:[%s2 + $0x18] sm:$0xff]
  %v855 = vld [vmem:[%s2 + $0x20] sm:$0xff]
  %v856 = vld [vmem:[%s2 + $0x28] sm:$0xff]
  %v857 = vld [vmem:[%s2 + $0x30] sm:$0xff]
  %v858 = vld [vmem:[%s2 + $0x38] sm:$0xff]
  %v859 = vld [vmem:[%s2 + $0x40] sm:$0xff]
  %v860 = vld [vmem:[%s2 + $0x48] sm:$0xff]
  %v861 = vld [vmem:[%s2 + $0x50] sm:$0xff]
  %v862 = vld [vmem:[%s2 + $0x58] sm:$0xff]
  %v863 = vld [vmem:[%s2 + $0x60] sm:$0xff]
  %v864 = vld [vmem:[%s2 + $0x68] sm:$0xff]
  %v865 = vld [vmem:[%s2 + $0x70] sm:$0xff]
  %v866 = vld [vmem:[%s2 + $0x78] sm:$0x3f]
  %v867 = vmul.f32 %v835, %v851
  %v868 = vmul.f32 %v836, %v852
  %v869 = vmul.f32 %v837, %v853
  %v870 = vmul.f32 %v838, %v854
  %v871 = vmul.f32 %v839, %v855
  %v872 = vmul.f32 %v840, %v856
  %v873 = vmul.f32 %v841, %v857
  %v874 = vmul.f32 %v842, %v858
  %v875 = vmul.f32 %v843, %v859
  %v876 = vmul.f32 %v844, %v860
  %v877 = vmul.f32 %v845, %v861
  %v878 = vmul.f32 %v846, %v862
  %v879 = vmul.f32 %v847, %v863
  %v880 = vmul.f32 %v848, %v864
  %v881 = vmul.f32 %v849, %v865
  %v882 = vmul.f32 %v850, %v866
  %vm883 = vcmask 15360
  %v884 = vsel %vm883, %v867, 0.0
  %v885 = vsel %vm883, %v868, 0.0
  %v886 = vadd.f32 %v884, %v885
  %v887 = vsel %vm883, %v869, 0.0
  %v888 = vadd.f32 %v886, %v887
  %v889 = vsel %vm883, %v870, 0.0
  %v890 = vadd.f32 %v888, %v889
  %v891 = vsel %vm883, %v871, 0.0
  %v892 = vadd.f32 %v890, %v891
  %v893 = vsel %vm883, %v872, 0.0
  %v894 = vadd.f32 %v892, %v893
  %v895 = vsel %vm883, %v873, 0.0
  %v896 = vadd.f32 %v894, %v895
  %v897 = vsel %vm883, %v874, 0.0
  %v898 = vadd.f32 %v896, %v897
  %v899 = vsel %vm883, %v875, 0.0
  %v900 = vadd.f32 %v898, %v899
  %v901 = vsel %vm883, %v876, 0.0
  %v902 = vadd.f32 %v900, %v901
  %v903 = vsel %vm883, %v877, 0.0
  %v904 = vadd.f32 %v902, %v903
  %v905 = vsel %vm883, %v878, 0.0
  %v906 = vadd.f32 %v904, %v905
  %v907 = vsel %vm883, %v879, 0.0
  %v908 = vadd.f32 %v906, %v907
  %v909 = vsel %vm883, %v880, 0.0
  %v910 = vadd.f32 %v908, %v909
  %v911 = vsel %vm883, %v881, 0.0
  %v912 = vadd.f32 %v910, %v911
  %vm913 = vcmask 13312
  %v914 = vsel %vm913, %v882, 0.0
  %v915 = vadd.f32 %v912, %v914
  %v916 = vrot.slane %v915, 4
  %v917 = vadd.f32 %v915, %v916
  %v918 = vrot.slane %v917, 2
  %v919 = vadd.f32 %v917, %v918
  %v920 = vrot.slane %v919, 1
  %v921 = vadd.f32 %v919, %v920
  %vm922 = vcmask 8192
  %923 = vst.msk [vmem:[%s3] sm:$0x1] %vm922, %v921
  // Predicated region
  $region14: #{model_forward.8} parent=0 // pred_check
    _
  $region15: #{model_forward.8} parent=0 // pred_check_branch
    %925 = sbr.rel (0) target = $region17
  $region16: #{model_forward.8} parent=0 // pred_region
    _
  $region17: #{model_forward.8} parent=0 // pred_fallthru
    _
  // Predicated region
  $region18: #{model_forward.8} parent=0 // pred_check
    _
  $region19: #{model_forward.8} parent=0 // pred_check_branch
    %927 = sbr.rel (0) target = $region21
  $region20: #{model_forward.8} parent=0 // pred_region
    _
  $region21: #{model_forward.8} parent=0 // pred_fallthru
    _

</llo_original>
